<compile_context>
chip_gen: v5e
topology: v5e:2x2
jax: 0.10.0
libtpu: 0.0.40
codegen_flags: <defaults>
</compile_context>

<pallas_src>
import functools
import math

import jax
import jax.numpy as jnp
from jax.experimental import pallas as pl
from jax.experimental.pallas import tpu as pltpu


# --------------------------- device-aware defaults ----------------------------

def _default_tm():
    # v7x has 64 MiB VMEM per TensorCore -> keep 256-row tiles;
    # v5e/v6e have 128 MiB -> 512 rows halves weight re-streaming.
    try:
        kind = jax.devices()[0].device_kind.lower()
    except Exception:
        return 256
    return 256 if "v7" in kind else 512


_DEFAULT_TM = _default_tm()
# Raised above v5e's 16 MiB scoped default; below v7x's 64 MiB physical VMEM.
_VMEM_LIMIT = 48 * 1024 * 1024


def _tile(dim, desired, granule):
    """Largest divisor of `dim` that is <= `desired` and a multiple of
    `granule`.  Whole dim if dim <= desired (equal-to-full-dim blocks are
    always layout-legal).  Only if no granule-aligned divisor exists (never at
    BERT shapes) do we fall back to the whole dim."""
    if dim <= desired:
        return dim
    for t in range(desired, granule - 1, -1):
        if dim % t == 0 and t % granule == 0:
            return t
    return dim


# ----------------------------- dense (tiled) ----------------------------------

def _dense_kernel(x_ref, w_ref, b_ref, o_ref, acc_ref, *, activation):
    @pl.when(pl.program_id(2) == 0)
    def _():
        acc_ref[...] = jnp.zeros_like(acc_ref)

    acc_ref[...] += jnp.dot(x_ref[...], w_ref[...],
                            preferred_element_type=jnp.float32)

    @pl.when(pl.program_id(2) == pl.num_programs(2) - 1)
    def _():
        y = acc_ref[...] + b_ref[...]
        if activation == "gelu":
            # TODO(synk): tanh-approx GELU; HF BERT default is exact erf GELU
            # (small logits drift vs. the PyTorch reference).
            y = 0.5 * y * (1.0 + jnp.tanh(
                0.7978845608028654 * (y + 0.044715 * y * y * y)))
        o_ref[...] = y.astype(o_ref.dtype)


def dense(x, w, b, activation=None, out_dtype=jnp.bfloat16,
          tm=None, tn=256, tk=256):
    """x: (M, K) bf16, w: (K, N) bf16 (pre-cast), b: (1, N) f32 -> (M, N)."""
    M, K = x.shape
    N = w.shape[1]
    tm = _tile(M, tm if tm is not None else _DEFAULT_TM, 8)
    tn = _tile(N, tn, 128)
    tk = _tile(K, tk, 128)
    kern = functools.partial(_dense_kernel, activation=activation)
    return pl.pallas_call(
        kern,
        grid=(M // tm, N // tn, K // tk),
        in_specs=[
            pl.BlockSpec((tm, tk), lambda i, j, k: (i, k)),
            pl.BlockSpec((tk, tn), lambda i, j, k: (k, j)),
            pl.BlockSpec((1, tn), lambda i, j, k: (0, j)),
        ],
        out_specs=pl.BlockSpec((tm, tn), lambda i, j, k: (i, j)),
        out_shape=jax.ShapeDtypeStruct((M, N), out_dtype),
        scratch_shapes=[pltpu.VMEM((tm, tn), jnp.float32)],
        compiler_params=pltpu.CompilerParams(
            dimension_semantics=("parallel", "parallel", "arbitrary"),
            vmem_limit_bytes=_VMEM_LIMIT),
    )(x, w, b)


# ----------------- dense + bias + residual + LayerNorm (fused) ----------------

def _dense_res_ln_kernel(x_ref, w_ref, b_ref, r_ref, g_ref, bb_ref,
                         o_ref, acc_ref):
    @pl.when(pl.program_id(1) == 0)
    def _():
        acc_ref[...] = jnp.zeros_like(acc_ref)

    acc_ref[...] += jnp.dot(x_ref[...], w_ref[...],
                            preferred_element_type=jnp.float32)

    @pl.when(pl.program_id(1) == pl.num_programs(1) - 1)
    def _():
        y = acc_ref[...] + b_ref[...] + r_ref[...].astype(jnp.float32)
        mu = jnp.mean(y, axis=-1, keepdims=True)
        d = y - mu
        var = jnp.mean(d * d, axis=-1, keepdims=True)
        inv = jax.lax.rsqrt(var + 1e-12)          # BERT LayerNorm eps
        o_ref[...] = (d * inv * g_ref[...] + bb_ref[...]).astype(o_ref.dtype)


def dense_residual_ln(x, w, b, residual, gamma, beta,
                      out_dtype=jnp.bfloat16, tm=None, tk=256):
    """(x @ w + b + residual) -> LayerNorm, fused.  N (= hidden) kept whole so
    the LN reduction stays inside one output block."""
    M, K = x.shape
    N = w.shape[1]
    tm = _tile(M, tm if tm is not None else _DEFAULT_TM, 8)
    tk = _tile(K, tk, 128)
    return pl.pallas_call(
        _dense_res_ln_kernel,
        grid=(M // tm, K // tk),
        in_specs=[
            pl.BlockSpec((tm, tk), lambda i, k: (i, k)),
            pl.BlockSpec((tk, N), lambda i, k: (k, 0)),
            pl.BlockSpec((1, N), lambda i, k: (0, 0)),
            pl.BlockSpec((tm, N), lambda i, k: (i, 0)),
            pl.BlockSpec((1, N), lambda i, k: (0, 0)),
            pl.BlockSpec((1, N), lambda i, k: (0, 0)),
        ],
        out_specs=pl.BlockSpec((tm, N), lambda i, k: (i, 0)),
        out_shape=jax.ShapeDtypeStruct((M, N), out_dtype),
        scratch_shapes=[pltpu.VMEM((tm, N), jnp.float32)],
        compiler_params=pltpu.CompilerParams(
            dimension_semantics=("parallel", "arbitrary"),
            vmem_limit_bytes=_VMEM_LIMIT),
    )(x, w, b, residual, gamma, beta)


# ------------------------------ LayerNorm (rows) -------------------------------

def _ln_kernel(x_ref, g_ref, b_ref, o_ref):
    x = x_ref[...].astype(jnp.float32)
    mu = jnp.mean(x, axis=-1, keepdims=True)
    d = x - mu
    var = jnp.mean(d * d, axis=-1, keepdims=True)
    inv = jax.lax.rsqrt(var + 1e-12)
    o_ref[...] = (d * inv * g_ref[...] + b_ref[...]).astype(o_ref.dtype)


def layernorm(x, g, b, out_dtype=jnp.bfloat16, tm=None):
    """x: (M, H);  g, b: (1, H) f32 (pre-reshaped).  Streaming row-tiled LN."""
    M, H = x.shape
    tm = _tile(M, tm if tm is not None else 2 * _DEFAULT_TM, 8)
    return pl.pallas_call(
        _ln_kernel,
        grid=(M // tm,),
        in_specs=[
            pl.BlockSpec((tm, H), lambda i: (i, 0)),
            pl.BlockSpec((1, H), lambda i: (0, 0)),
            pl.BlockSpec((1, H), lambda i: (0, 0)),
        ],
        out_specs=pl.BlockSpec((tm, H), lambda i: (i, 0)),
        out_shape=jax.ShapeDtypeStruct((M, H), out_dtype),
        compiler_params=pltpu.CompilerParams(
            dimension_semantics=("parallel",),
            vmem_limit_bytes=_VMEM_LIMIT),
    )(x, g, b)


# --------------------------------- attention -----------------------------------

def _mha_group(q_all, k_all, v_all, bias, heads, dh, scale):
    """q/k/v_all: (S, heads*dh) bf16, bias: (1, S) f32.
    Returns lane-dense (S, heads*dh) f32 context for the whole head group."""
    ctxs = []
    for h in range(heads):
        q = q_all[:, h * dh:(h + 1) * dh]
        k = k_all[:, h * dh:(h + 1) * dh]
        v = v_all[:, h * dh:(h + 1) * dh]
        # contract on the Dh axis of both operands -> no materialized K^T
        s = jax.lax.dot_general(q, k, (((1,), (1,)), ((), ())),
                                preferred_element_type=jnp.float32)
        s = s * scale + bias
        s = s - jnp.max(s, axis=-1, keepdims=True)
        p = jnp.exp(s)
        p = p * pl.reciprocal(jnp.sum(p, axis=-1, keepdims=True), approx=True)
        ctxs.append(jnp.dot(p.astype(v.dtype), v,
                            preferred_element_type=jnp.float32))
    return ctxs[0] if heads == 1 else jnp.concatenate(ctxs, axis=-1)


def _attn_kernel_grouped(q_ref, k_ref, v_ref, m_ref, o_ref, *, heads, dh, scale):
    # One lane-dense store for the whole head group.
    o_ref[...] = _mha_group(q_ref[...], k_ref[...], v_ref[...], m_ref[0],
                            heads, dh, scale).astype(o_ref.dtype)


def _attn_kernel_fused(qkv_ref, m_ref, o_ref, *, heads, dh, scale):
    # Small-H fallback: whole (S, 3H) block, single full-width store.
    H = heads * dh
    qkv = qkv_ref[...]
    o_ref[...] = _mha_group(qkv[:, :H], qkv[:, H:2 * H], qkv[:, 2 * H:3 * H],
                            m_ref[0], heads, dh, scale).astype(o_ref.dtype)


def attention(qkv, mask_bias, *, batch, seq, nh, dh, out_dtype=jnp.bfloat16):
    """qkv: (B*S, 3H) bf16 fused projection, mask_bias: (B, 1, S) f32
    -> context (B*S, H).  Heads are grouped into >=128-lane slabs and placed on
    the grid so each step's output store is lane-dense and batch*groups steps
    are available for megacore sharding."""
    # TODO(synk): flash-style KV tiling (online softmax) for long sequences;
    # the full (S, S) score block per head is resident in VMEM here (crosses
    # the VMEM budget at smaller S on v7x's 64 MiB than on v5e/v6e).
    BS, threeH = qkv.shape
    H = nh * dh
    scale = 1.0 / math.sqrt(dh)

    # smallest head group whose width is a multiple of 128 lanes
    hpg = None
    for g in range(1, nh + 1):
        if nh % g == 0 and (g * dh) % 128 == 0:
            hpg = g
            break

    if hpg is not None:
        GD = hpg * dh
        n_groups = nh // hpg
        kcol = H // GD            # column-block offset of K inside (B*S, 3H)
        kern = functools.partial(_attn_kernel_grouped,
                                 heads=hpg, dh=dh, scale=scale)
        return pl.pallas_call(
            kern,
            grid=(batch, n_groups),
            in_specs=[
                pl.BlockSpec((seq, GD), lambda b, g: (b, g)),            # Q
                pl.BlockSpec((seq, GD), lambda b, g: (b, kcol + g)),     # K
                pl.BlockSpec((seq, GD), lambda b, g: (b, 2 * kcol + g)),  # V
                pl.BlockSpec((1, 1, seq), lambda b, g: (b, 0, 0)),
            ],
            out_specs=pl.BlockSpec((seq, GD), lambda b, g: (b, g)),
            out_shape=jax.ShapeDtypeStruct((BS, H), out_dtype),
            compiler_params=pltpu.CompilerParams(
                dimension_semantics=("parallel", "parallel"),
                vmem_limit_bytes=_VMEM_LIMIT),
        )(qkv, mask_bias)

    # H < 128 (demo sizes): all heads of one batch row-slab per grid step,
    # whole-width QKV block (layout-legal: block == full array dims).
    kern = functools.partial(_attn_kernel_fused, heads=nh, dh=dh, scale=scale)
    return pl.pallas_call(
        kern,
        grid=(batch,),
        in_specs=[
            pl.BlockSpec((seq, threeH), lambda b: (b, 0)),
            pl.BlockSpec((1, 1, seq), lambda b: (b, 0, 0)),
        ],
        out_specs=pl.BlockSpec((seq, H), lambda b: (b, 0)),
        out_shape=jax.ShapeDtypeStruct((BS, H), out_dtype),
        compiler_params=pltpu.CompilerParams(
            dimension_semantics=("parallel",),
            vmem_limit_bytes=_VMEM_LIMIT),
    )(qkv, mask_bias)


# ----------------------- pooler + classifier head (fused) ----------------------

def _pool_head_kernel(cls_ref, pw_ref, pb_ref, ow_ref, ob_ref, o_ref):
    pooled = jnp.tanh(
        jnp.dot(cls_ref[...], pw_ref[...], preferred_element_type=jnp.float32)
        + pb_ref[...])
    logits = jnp.dot(pooled.astype(ow_ref.dtype), ow_ref[...],
                     preferred_element_type=jnp.float32) + ob_ref[...]
    o_ref[...] = logits


def pooler_and_head(cls_tok, pool_w, pool_b, out_w_pad, out_b_pad, n_labels):
    """cls_tok: (B, H) bf16, pool_w: (H, H) bf16, pool_b: (1, H) f32,
    out_w_pad: (H, 128) bf16, out_b_pad: (1, 128) f32 (pre-padded lane-dense)."""
    B, H = cls_tok.shape
    n_pad = out_w_pad.shape[1]
    logits = pl.pallas_call(
        _pool_head_kernel,
        grid=(1,),
        in_specs=[
            pl.BlockSpec((B, H), lambda i: (0, 0)),
            pl.BlockSpec((H, H), lambda i: (0, 0)),
            pl.BlockSpec((1, H), lambda i: (0, 0)),
            pl.BlockSpec((H, n_pad), lambda i: (0, 0)),
            pl.BlockSpec((1, n_pad), lambda i: (0, 0)),
        ],
        out_specs=pl.BlockSpec((B, n_pad), lambda i: (0, 0)),
        out_shape=jax.ShapeDtypeStruct((B, n_pad), jnp.float32),
    )(cls_tok, pool_w, pool_b, out_w_pad, out_b_pad)
    return logits[:, :n_labels]


# ------------------------------- Model (glue) ----------------------------------

CFG = dict(
    vocab_size=100,
    hidden=32,
    num_layers=2,
    num_heads=2,
    intermediate=64,
    max_position=16,
    type_vocab=2,
    n_labels=3,
)


def init_params(key, cfg):
    """f32 'PyTorch-style' parameters."""
    H, I = cfg["hidden"], cfg["intermediate"]
    std = 0.02
    keys = iter(jax.random.split(key, 64))

    def nrm(shape):
        return (std * jax.random.normal(next(keys), shape)).astype(jnp.float32)

    params = dict(
        word_emb=nrm((cfg["vocab_size"], H)),
        pos_emb=nrm((cfg["max_position"], H)),
        type_emb=nrm((cfg["type_vocab"], H)),
        emb_ln_g=jnp.ones((H,), jnp.float32),
        emb_ln_b=jnp.zeros((H,), jnp.float32),
        pool_w=nrm((H, H)),
        pool_b=jnp.zeros((H,), jnp.float32),
        out_w=nrm((H, cfg["n_labels"])),
        out_b=jnp.zeros((cfg["n_labels"],), jnp.float32),
        layers=[],
    )
    for _ in range(cfg["num_layers"]):
        params["layers"].append(dict(
            # fused Q/K/V projection: one (H, 3H) matmul
            qkv_w=nrm((H, 3 * H)), qkv_b=jnp.zeros((3 * H,), jnp.float32),
            ao_w=nrm((H, H)), ao_b=jnp.zeros((H,), jnp.float32),
            ln1_g=jnp.ones((H,), jnp.float32), ln1_b=jnp.zeros((H,), jnp.float32),
            i_w=nrm((H, I)), i_b=jnp.zeros((I,), jnp.float32),
            o_w=nrm((I, H)), o_b=jnp.zeros((H,), jnp.float32),
            ln2_g=jnp.ones((H,), jnp.float32), ln2_b=jnp.zeros((H,), jnp.float32),
        ))
    return params


def prepare_params(params, cfg, n_pad=128):
    """One-time cast/pack so the per-forward kernels see ready-to-use operands:
    bf16 weights, f32 (1, N) biases / LN params, pre-padded classifier head.
    # TODO(synk): optional fp8 weight quantization for the v7x MXU path.
    """
    H = cfg["hidden"]
    n_labels = cfg["n_labels"]

    def row(v):
        return v.reshape(1, -1).astype(jnp.float32)

    prepped = dict(
        word_emb=params["word_emb"],              # gathers stay f32 in JAX glue
        pos_emb=params["pos_emb"],
        type_emb=params["type_emb"],
        emb_ln_g=row(params["emb_ln_g"]),
        emb_ln_b=row(params["emb_ln_b"]),
        pool_w=params["pool_w"].astype(jnp.bfloat16),
        pool_b=row(params["pool_b"]),
        out_w=jnp.pad(params["out_w"],
                      ((0, 0), (0, n_pad - n_labels))).astype(jnp.bfloat16),
        out_b=row(jnp.pad(params["out_b"], (0, n_pad - n_labels))),
        layers=[],
    )
    for lp in params["layers"]:
        prepped["layers"].append(dict(
            qkv_w=lp["qkv_w"].astype(jnp.bfloat16), qkv_b=row(lp["qkv_b"]),
            ao_w=lp["ao_w"].astype(jnp.bfloat16), ao_b=row(lp["ao_b"]),
            ln1_g=row(lp["ln1_g"]), ln1_b=row(lp["ln1_b"]),
            i_w=lp["i_w"].astype(jnp.bfloat16), i_b=row(lp["i_b"]),
            o_w=lp["o_w"].astype(jnp.bfloat16), o_b=row(lp["o_b"]),
            ln2_g=row(lp["ln2_g"]), ln2_b=row(lp["ln2_b"]),
        ))
    return prepped


def bert_classifier_forward(params, input_ids, token_type_ids, attention_mask, cfg):
    B, S = input_ids.shape
    H = cfg["hidden"]
    NH = cfg["num_heads"]
    Dh = H // NH

    # --- embeddings (gathers in JAX glue, LayerNorm in Pallas) ---
    emb = (params["word_emb"][input_ids]
           + params["pos_emb"][jnp.arange(S)][None, :, :]
           + params["type_emb"][token_type_ids])                    # (B, S, H) f32
    h = layernorm(emb.reshape(B * S, H), params["emb_ln_g"], params["emb_ln_b"])
    # dropout is identity in eval mode

    # --- additive attention-mask bias, kept at (B, 1, S) (no per-head copy) ---
    mask_bias = ((1.0 - attention_mask.astype(jnp.float32)) * -10000.0
                 ).reshape(B, 1, S)

    # --- encoder layers ---
    for lp in params["layers"]:
        x = h                                                       # (B*S, H) bf16
        qkv = dense(x, lp["qkv_w"], lp["qkv_b"])                    # (B*S, 3H)
        ctx = attention(qkv, mask_bias, batch=B, seq=S, nh=NH, dh=Dh)
        # attention-output projection + bias + residual + LayerNorm, fused
        h1 = dense_residual_ln(ctx, lp["ao_w"], lp["ao_b"], x,
                               lp["ln1_g"], lp["ln1_b"])
        inter = dense(h1, lp["i_w"], lp["i_b"], activation="gelu")  # (B*S, I)
        # FFN-output projection + bias + residual + LayerNorm, fused
        h = dense_residual_ln(inter, lp["o_w"], lp["o_b"], h1,
                              lp["ln2_g"], lp["ln2_b"])

    # --- pooler (Linear + tanh on [CLS]) + classifier head, fused kernel ---
    cls = h.reshape(B, S, H)[:, 0, :]                               # (B, H)
    logits = pooler_and_head(cls, params["pool_w"], params["pool_b"],
                             params["out_w"], params["out_b"], cfg["n_labels"])
    # TODO(synk): BCEWithLogitsLoss branch (labels/increase_weight) is never
    # taken in the reference forward when labels is None; not implemented.
    return logits


# ------------------------------------ main --------------------------------------

if __name__ == "__main__":
    B, S = 2, 16
    key = jax.random.PRNGKey(0)
    k_param, k_ids = jax.random.split(key)

    params_f32 = init_params(k_param, CFG)
    params = prepare_params(params_f32, CFG)       # one-time cast/pack, outside jit

    input_ids = jax.random.randint(k_ids, (B, S), 0, CFG["vocab_size"], dtype=jnp.int32)
    token_type_ids = jnp.zeros((B, S), jnp.int32)
    attention_mask = jnp.ones((B, S), jnp.int32)

    fwd = jax.jit(functools.partial(bert_classifier_forward, cfg=CFG))
    logits = fwd(params, input_ids, token_type_ids, attention_mask)
    logits = jax.block_until_ready(logits)

    assert logits.shape == (B, CFG["n_labels"]) and logits.dtype == jnp.float32
    assert bool(jnp.all(jnp.isfinite(logits)))
    print("KERNEL_OK")
</pallas_src>

<mosaic_0001>
module attributes {stable_mosaic.version = 11 : i64} {
  func.func @_ln_kernel(%arg0: i32, %arg1: memref<32x32xf32, #tpu.memory_space<vmem>>, %arg2: memref<1x32xf32, #tpu.memory_space<vmem>>, %arg3: memref<1x32xf32, #tpu.memory_space<vmem>>, %arg4: memref<32x32xbf16, #tpu.memory_space<vmem>>) attributes {dimension_semantics = [#tpu.dimension_semantics<parallel>], iteration_bounds = array<i64: 1>, scalar_prefetch = 0 : i64, scratch_operands = 0 : i64, tpu.core_type = #tpu.core_type<tc>, window_params = [{transform_indices = @transform_0, window_bounds = array<i64: 32, 32>}, {pipeline_mode = #tpu.pipeline_mode<synchronous>, transform_indices = @transform_1, window_bounds = array<i64: 1, 32>}, {pipeline_mode = #tpu.pipeline_mode<synchronous>, transform_indices = @transform_2, window_bounds = array<i64: 1, 32>}, {transform_indices = @transform_3, window_bounds = array<i64: 32, 32>}]} {
    %c0 = arith.constant 0 : index
    %c0_0 = arith.constant 0 : index
    %0 = vector.load %arg1[%c0, %c0_0] : memref<32x32xf32, #tpu.memory_space<vmem>>, vector<32x32xf32>
    %cst = arith.constant dense<0.000000e+00> : vector<32xf32>
    %1 = vector.multi_reduction <add>, %0, %cst [1] : vector<32x32xf32> to vector<32xf32>
    %2 = vector.shape_cast %1 : vector<32xf32> to vector<32x1xf32>
    %cst_1 = arith.constant 3.200000e+01 : f32
    %3 = vector.broadcast %cst_1 : f32 to vector<32x1xf32>
    %4 = arith.divf %2, %3 : vector<32x1xf32>
    %5 = vector.broadcast %4 : vector<32x1xf32> to vector<32x32xf32>
    %6 = arith.subf %0, %5 : vector<32x32xf32>
    %7 = arith.mulf %6, %6 : vector<32x32xf32>
    %cst_2 = arith.constant dense<0.000000e+00> : vector<32xf32>
    %8 = vector.multi_reduction <add>, %7, %cst_2 [1] : vector<32x32xf32> to vector<32xf32>
    %9 = vector.shape_cast %8 : vector<32xf32> to vector<32x1xf32>
    %cst_3 = arith.constant 3.200000e+01 : f32
    %10 = vector.broadcast %cst_3 : f32 to vector<32x1xf32>
    %11 = arith.divf %9, %10 : vector<32x1xf32>
    %cst_4 = arith.constant 9.99999996E-13 : f32
    %12 = vector.broadcast %cst_4 : f32 to vector<32x1xf32>
    %13 = arith.addf %11, %12 : vector<32x1xf32>
    %14 = math.rsqrt %13 : vector<32x1xf32>
    %15 = vector.broadcast %14 : vector<32x1xf32> to vector<32x32xf32>
    %16 = arith.mulf %6, %15 : vector<32x32xf32>
    %c0_5 = arith.constant 0 : index
    %c0_6 = arith.constant 0 : index
    %17 = vector.load %arg2[%c0_5, %c0_6] : memref<1x32xf32, #tpu.memory_space<vmem>>, vector<1x32xf32>
    %18 = vector.broadcast %17 : vector<1x32xf32> to vector<32x32xf32>
    %19 = arith.mulf %16, %18 : vector<32x32xf32>
    %c0_7 = arith.constant 0 : index
    %c0_8 = arith.constant 0 : index
    %20 = vector.load %arg3[%c0_7, %c0_8] : memref<1x32xf32, #tpu.memory_space<vmem>>, vector<1x32xf32>
    %21 = vector.broadcast %20 : vector<1x32xf32> to vector<32x32xf32>
    %22 = arith.addf %19, %21 : vector<32x32xf32>
    %23 = arith.truncf %22 : vector<32x32xf32> to vector<32x32xbf16>
    %c0_9 = arith.constant 0 : index
    %c0_10 = arith.constant 0 : index
    %24 = vector.load %arg4[%c0_9, %c0_10] : memref<32x32xbf16, #tpu.memory_space<vmem>>, vector<32x32xbf16>
    tpu.vector_store %arg4[%c0_9, %c0_10], %23 {strides = array<i32>} : memref<32x32xbf16, #tpu.memory_space<vmem>>, vector<32x32xbf16>,
    return
  }
  func.func @transform_0(%arg0: i32) -> (i32, i32) {
    %c0_i32 = arith.constant 0 : i32
    %c0_i32_0 = arith.constant 0 : i32
    return %arg0, %c0_i32 : i32, i32
  }
  func.func @transform_1(%arg0: i32) -> (i32, i32) {
    %c0_i32 = arith.constant 0 : i32
    %c0_i32_0 = arith.constant 0 : i32
    %c0_i32_1 = arith.constant 0 : i32
    return %c0_i32, %c0_i32_0 : i32, i32
  }
  func.func @transform_2(%arg0: i32) -> (i32, i32) {
    %c0_i32 = arith.constant 0 : i32
    %c0_i32_0 = arith.constant 0 : i32
    %c0_i32_1 = arith.constant 0 : i32
    return %c0_i32, %c0_i32_0 : i32, i32
  }
  func.func @transform_3(%arg0: i32) -> (i32, i32) {
    %c0_i32 = arith.constant 0 : i32
    %c0_i32_0 = arith.constant 0 : i32
    return %arg0, %c0_i32 : i32, i32
  }
}

module attributes {stable_mosaic.version = 11 : i64} {
  func.func @_dense_kernel(%arg0: i32, %arg1: i32, %arg2: i32, %arg3: memref<32x32xbf16, #tpu.memory_space<vmem>>, %arg4: memref<32x96xbf16, #tpu.memory_space<vmem>>, %arg5: memref<1x96xf32, #tpu.memory_space<vmem>>, %arg6: memref<32x96xbf16, #tpu.memory_space<vmem>>, %arg7: memref<32x96xf32, #tpu.memory_space<vmem>>) attributes {dimension_semantics = [#tpu.dimension_semantics<parallel>, #tpu.dimension_semantics<parallel>, #tpu.dimension_semantics<arbitrary>], iteration_bounds = array<i64: 1, 1, 1>, scalar_prefetch = 0 : i64, scratch_operands = 1 : i64, tpu.core_type = #tpu.core_type<tc>, window_params = [{transform_indices = @transform_0, window_bounds = array<i64: 32, 32>}, {transform_indices = @transform_1, window_bounds = array<i64: 32, 96>}, {transform_indices = @transform_2, window_bounds = array<i64: 1, 96>}, {transform_indices = @transform_3, window_bounds = array<i64: 32, 96>}]} {
    %c0_i32 = arith.constant 0 : i32
    %0 = arith.cmpi eq, %arg2, %c0_i32 : i32
    %1 = arith.extui %0 : i1 to i32
    %c0_i32_0 = arith.constant 0 : i32
    %2 = arith.cmpi ne, %1, %c0_i32_0 : i32
    scf.if %2 {
      %cst_10 = arith.constant 0.000000e+00 : f32
      %12 = vector.broadcast %cst_10 : f32 to vector<32x96xf32>
      %c0_11 = arith.constant 0 : index
      %c0_12 = arith.constant 0 : index
      %13 = vector.load %arg7[%c0_11, %c0_12] : memref<32x96xf32, #tpu.memory_space<vmem>>, vector<32x96xf32>
      tpu.vector_store %arg7[%c0_11, %c0_12], %12 {strides = array<i32>} : memref<32x96xf32, #tpu.memory_space<vmem>>, vector<32x96xf32>,
    } else {
    }
    %c0 = arith.constant 0 : index
    %c0_1 = arith.constant 0 : index
    %3 = vector.load %arg7[%c0, %c0_1] : memref<32x96xf32, #tpu.memory_space<vmem>>, vector<32x96xf32>
    %c0_2 = arith.constant 0 : index
    %c0_3 = arith.constant 0 : index
    %4 = vector.load %arg3[%c0_2, %c0_3] : memref<32x32xbf16, #tpu.memory_space<vmem>>, vector<32x32xbf16>
    %c0_4 = arith.constant 0 : index
    %c0_5 = arith.constant 0 : index
    %5 = vector.load %arg4[%c0_4, %c0_5] : memref<32x96xbf16, #tpu.memory_space<vmem>>, vector<32x96xbf16>
    %cst = arith.constant dense<0.000000e+00> : vector<32x96xf32>
    %6 = tpu.matmul %4, %5, %cst {dimension_numbers = #tpu.dot_dimension_numbers<[1], [0], [0], [1], [0, 0, 1, 1], [], []>} : vector<32x32xbf16>, vector<32x96xbf16>, vector<32x96xf32> -> vector<32x96xf32>
    %7 = arith.addf %3, %6 : vector<32x96xf32>
    %c0_6 = arith.constant 0 : index
    %c0_7 = arith.constant 0 : index
    %8 = vector.load %arg7[%c0_6, %c0_7] : memref<32x96xf32, #tpu.memory_space<vmem>>, vector<32x96xf32>
    tpu.vector_store %arg7[%c0_6, %c0_7], %7 {strides = array<i32>} : memref<32x96xf32, #tpu.memory_space<vmem>>, vector<32x96xf32>,
    %c0_i32_8 = arith.constant 0 : i32
    %9 = arith.cmpi eq, %arg2, %c0_i32_8 : i32
    %10 = arith.extui %9 : i1 to i32
    %c0_i32_9 = arith.constant 0 : i32
    %11 = arith.cmpi ne, %10, %c0_i32_9 : i32
    scf.if %11 {
      %c0_10 = arith.constant 0 : index
      %c0_11 = arith.constant 0 : index
      %12 = vector.load %arg7[%c0_10, %c0_11] : memref<32x96xf32, #tpu.memory_space<vmem>>, vector<32x96xf32>
      %c0_12 = arith.constant 0 : index
      %c0_13 = arith.constant 0 : index
      %13 = vector.load %arg5[%c0_12, %c0_13] : memref<1x96xf32, #tpu.memory_space<vmem>>, vector<1x96xf32>
      %14 = vector.broadcast %13 : vector<1x96xf32> to vector<32x96xf32>
      %15 = arith.addf %12, %14 : vector<32x96xf32>
      %16 = arith.truncf %15 : vector<32x96xf32> to vector<32x96xbf16>
      %c0_14 = arith.constant 0 : index
      %c0_15 = arith.constant 0 : index
      %17 = vector.load %arg6[%c0_14, %c0_15] : memref<32x96xbf16, #tpu.memory_space<vmem>>, vector<32x96xbf16>
      tpu.vector_store %arg6[%c0_14, %c0_15], %16 {strides = array<i32>} : memref<32x96xbf16, #tpu.memory_space<vmem>>, vector<32x96xbf16>,
    } else {
    }
    return
  }
  func.func @transform_0(%arg0: i32, %arg1: i32, %arg2: i32) -> (i32, i32) {
    %c0_i32 = arith.constant 0 : i32
    return %arg0, %arg2 : i32, i32
  }
  func.func @transform_1(%arg0: i32, %arg1: i32, %arg2: i32) -> (i32, i32) {
    %c0_i32 = arith.constant 0 : i32
    return %arg2, %arg1 : i32, i32
  }
  func.func @transform_2(%arg0: i32, %arg1: i32, %arg2: i32) -> (i32, i32) {
    %c0_i32 = arith.constant 0 : i32
    %c0_i32_0 = arith.constant 0 : i32
    return %c0_i32, %arg1 : i32, i32
  }
  func.func @transform_3(%arg0: i32, %arg1: i32, %arg2: i32) -> (i32, i32) {
    %c0_i32 = arith.constant 0 : i32
    return %arg0, %arg1 : i32, i32
  }
}

module attributes {stable_mosaic.version = 11 : i64} {
  func.func @_attn_kernel_fused(%arg0: i32, %arg1: memref<16x96xbf16, #tpu.memory_space<vmem>>, %arg2: memref<1x1x16xf32, #tpu.memory_space<vmem>>, %arg3: memref<16x32xbf16, #tpu.memory_space<vmem>>) attributes {dimension_semantics = [#tpu.dimension_semantics<parallel>], iteration_bounds = array<i64: 2>, scalar_prefetch = 0 : i64, scratch_operands = 0 : i64, tpu.core_type = #tpu.core_type<tc>, window_params = [{transform_indices = @transform_0, window_bounds = array<i64: 16, 96>}, {transform_indices = @transform_1, window_bounds = array<i64: 1, 1, 16>}, {transform_indices = @transform_2, window_bounds = array<i64: 16, 32>}]} {
    %c0 = arith.constant 0 : index
    %c0_0 = arith.constant 0 : index
    %0 = vector.load %arg1[%c0, %c0_0] : memref<16x96xbf16, #tpu.memory_space<vmem>>, vector<16x96xbf16>
    %1 = vector.extract_strided_slice %0 {offsets = [0, 0], sizes = [16, 32], strides = [1, 1]} : vector<16x96xbf16> to vector<16x32xbf16>
    %2 = vector.extract_strided_slice %0 {offsets = [0, 32], sizes = [16, 32], strides = [1, 1]} : vector<16x96xbf16> to vector<16x32xbf16>
    %3 = vector.extract_strided_slice %0 {offsets = [0, 64], sizes = [16, 32], strides = [1, 1]} : vector<16x96xbf16> to vector<16x32xbf16>
    %c0_1 = arith.constant 0 : index
    %c0_2 = arith.constant 0 : index
    %c0_3 = arith.constant 0 : index
    %4 = vector.load %arg2[%c0_1, %c0_2, %c0_3] : memref<1x1x16xf32, #tpu.memory_space<vmem>>, vector<1x1x16xf32>
    %5 = vector.shape_cast %4 : vector<1x1x16xf32> to vector<1x16xf32>
    %6 = vector.extract_strided_slice %1 {offsets = [0, 0], sizes = [16, 16], strides = [1, 1]} : vector<16x32xbf16> to vector<16x16xbf16>
    %7 = vector.extract_strided_slice %2 {offsets = [0, 0], sizes = [16, 16], strides = [1, 1]} : vector<16x32xbf16> to vector<16x16xbf16>
    %8 = vector.extract_strided_slice %3 {offsets = [0, 0], sizes = [16, 16], strides = [1, 1]} : vector<16x32xbf16> to vector<16x16xbf16>
    %cst = arith.constant dense<0.000000e+00> : vector<16x16xf32>
    %9 = tpu.matmul %6, %7, %cst {dimension_numbers = #tpu.dot_dimension_numbers<[1], [1], [0], [0], [0, 0, 1, 0], [], []>} : vector<16x16xbf16>, vector<16x16xbf16>, vector<16x16xf32> -> vector<16x16xf32>
    %cst_4 = arith.constant 2.500000e-01 : f32
    %10 = vector.broadcast %cst_4 : f32 to vector<16x16xf32>
    %11 = arith.mulf %9, %10 : vector<16x16xf32>
    %12 = vector.broadcast %5 : vector<1x16xf32> to vector<16x16xf32>
    %13 = arith.addf %11, %12 : vector<16x16xf32>
    %cst_5 = arith.constant dense<0xFF800000> : vector<16xf32>
    %14 = vector.multi_reduction <maximumf>, %13, %cst_5 [1] : vector<16x16xf32> to vector<16xf32>
    %15 = vector.shape_cast %14 : vector<16xf32> to vector<16x1xf32>
    %16 = vector.broadcast %15 : vector<16x1xf32> to vector<16x16xf32>
    %17 = arith.subf %13, %16 : vector<16x16xf32>
    %18 = math.exp %17 : vector<16x16xf32>
    %cst_6 = arith.constant dense<0.000000e+00> : vector<16xf32>
    %19 = vector.multi_reduction <add>, %18, %cst_6 [1] : vector<16x16xf32> to vector<16xf32>
    %20 = vector.shape_cast %19 : vector<16xf32> to vector<16x1xf32>
    %21 = tpu.reciprocal %20 {approx = true} : vector<16x1xf32> -> vector<16x1xf32>
    %22 = vector.broadcast %21 : vector<16x1xf32> to vector<16x16xf32>
    %23 = arith.mulf %18, %22 : vector<16x16xf32>
    %24 = arith.truncf %23 : vector<16x16xf32> to vector<16x16xbf16>
    %cst_7 = arith.constant dense<0.000000e+00> : vector<16x16xf32>
    %25 = tpu.matmul %24, %8, %cst_7 {dimension_numbers = #tpu.dot_dimension_numbers<[1], [0], [0], [1], [0, 0, 1, 1], [], []>} : vector<16x16xbf16>, vector<16x16xbf16>, vector<16x16xf32> -> vector<16x16xf32>
    %26 = vector.extract_strided_slice %1 {offsets = [0, 16], sizes = [16, 16], strides = [1, 1]} : vector<16x32xbf16> to vector<16x16xbf16>
    %27 = vector.extract_strided_slice %2 {offsets = [0, 16], sizes = [16, 16], strides = [1, 1]} : vector<16x32xbf16> to vector<16x16xbf16>
    %28 = vector.extract_strided_slice %3 {offsets = [0, 16], sizes = [16, 16], strides = [1, 1]} : vector<16x32xbf16> to vector<16x16xbf16>
    %cst_8 = arith.constant dense<0.000000e+00> : vector<16x16xf32>
    %29 = tpu.matmul %26, %27, %cst_8 {dimension_numbers = #tpu.dot_dimension_numbers<[1], [1], [0], [0], [0, 0, 1, 0], [], []>} : vector<16x16xbf16>, vector<16x16xbf16>, vector<16x16xf32> -> vector<16x16xf32>
    %cst_9 = arith.constant 2.500000e-01 : f32
    %30 = vector.broadcast %cst_9 : f32 to vector<16x16xf32>
    %31 = arith.mulf %29, %30 : vector<16x16xf32>
    %32 = vector.broadcast %5 : vector<1x16xf32> to vector<16x16xf32>
    %33 = arith.addf %31, %32 : vector<16x16xf32>
    %cst_10 = arith.constant dense<0xFF800000> : vector<16xf32>
    %34 = vector.multi_reduction <maximumf>, %33, %cst_10 [1] : vector<16x16xf32> to vector<16xf32>
    %35 = vector.shape_cast %34 : vector<16xf32> to vector<16x1xf32>
    %36 = vector.broadcast %35 : vector<16x1xf32> to vector<16x16xf32>
    %37 = arith.subf %33, %36 : vector<16x16xf32>
    %38 = math.exp %37 : vector<16x16xf32>
    %cst_11 = arith.constant dense<0.000000e+00> : vector<16xf32>
    %39 = vector.multi_reduction <add>, %38, %cst_11 [1] : vector<16x16xf32> to vector<16xf32>
    %40 = vector.shape_cast %39 : vector<16xf32> to vector<16x1xf32>
    %41 = tpu.reciprocal %40 {approx = true} : vector<16x1xf32> -> vector<16x1xf32>
    %42 = vector.broadcast %41 : vector<16x1xf32> to vector<16x16xf32>
    %43 = arith.mulf %38, %42 : vector<16x16xf32>
    %44 = arith.truncf %43 : vector<16x16xf32> to vector<16x16xbf16>
    %cst_12 = arith.constant dense<0.000000e+00> : vector<16x16xf32>
    %45 = tpu.matmul %44, %28, %cst_12 {dimension_numbers = #tpu.dot_dimension_numbers<[1], [0], [0], [1], [0, 0, 1, 1], [], []>} : vector<16x16xbf16>, vector<16x16xbf16>, vector<16x16xf32> -> vector<16x16xf32>
    %46 = tpu.concatenate %25, %45 in 1 : vector<16x16xf32>, vector<16x16xf32> -> vector<16x32xf32>
    %47 = arith.truncf %46 : vector<16x32xf32> to vector<16x32xbf16>
    %c0_13 = arith.constant 0 : index
    %c0_14 = arith.constant 0 : index
    %48 = vector.load %arg3[%c0_13, %c0_14] : memref<16x32xbf16, #tpu.memory_space<vmem>>, vector<16x32xbf16>
    tpu.vector_store %arg3[%c0_13, %c0_14], %47 {strides = array<i32>} : memref<16x32xbf16, #tpu.memory_space<vmem>>, vector<16x32xbf16>,
    return
  }
  func.func @transform_0(%arg0: i32) -> (i32, i32) {
    %c0_i32 = arith.constant 0 : i32
    %c0_i32_0 = arith.constant 0 : i32
    return %arg0, %c0_i32 : i32, i32
  }
  func.func @transform_1(%arg0: i32) -> (i32, i32, i32) {
    %c0_i32 = arith.constant 0 : i32
    %c0_i32_0 = arith.constant 0 : i32
    %c0_i32_1 = arith.constant 0 : i32
    return %arg0, %c0_i32, %c0_i32_0 : i32, i32, i32
  }
  func.func @transform_2(%arg0: i32) -> (i32, i32) {
    %c0_i32 = arith.constant 0 : i32
    %c0_i32_0 = arith.constant 0 : i32
    return %arg0, %c0_i32 : i32, i32
  }
}

module attributes {stable_mosaic.version = 11 : i64} {
  func.func @_dense_res_ln_kernel(%arg0: i32, %arg1: i32, %arg2: memref<32x32xbf16, #tpu.memory_space<vmem>>, %arg3: memref<32x32xbf16, #tpu.memory_space<vmem>>, %arg4: memref<1x32xf32, #tpu.memory_space<vmem>>, %arg5: memref<32x32xbf16, #tpu.memory_space<vmem>>, %arg6: memref<1x32xf32, #tpu.memory_space<vmem>>, %arg7: memref<1x32xf32, #tpu.memory_space<vmem>>, %arg8: memref<32x32xbf16, #tpu.memory_space<vmem>>, %arg9: memref<32x32xf32, #tpu.memory_space<vmem>>) attributes {dimension_semantics = [#tpu.dimension_semantics<parallel>, #tpu.dimension_semantics<arbitrary>], iteration_bounds = array<i64: 1, 1>, scalar_prefetch = 0 : i64, scratch_operands = 1 : i64, tpu.core_type = #tpu.core_type<tc>, window_params = [{transform_indices = @transform_0, window_bounds = array<i64: 32, 32>}, {transform_indices = @transform_1, window_bounds = array<i64: 32, 32>}, {pipeline_mode = #tpu.pipeline_mode<synchronous>, transform_indices = @transform_2, window_bounds = array<i64: 1, 32>}, {transform_indices = @transform_3, window_bounds = array<i64: 32, 32>}, {pipeline_mode = #tpu.pipeline_mode<synchronous>, transform_indices = @transform_4, window_bounds = array<i64: 1, 32>}, {pipeline_mode = #tpu.pipeline_mode<synchronous>, transform_indices = @transform_5, window_bounds = array<i64: 1, 32>}, {transform_indices = @transform_6, window_bounds = array<i64: 32, 32>}]} {
    %c0_i32 = arith.constant 0 : i32
    %0 = arith.cmpi eq, %arg1, %c0_i32 : i32
    %1 = arith.extui %0 : i1 to i32
    %c0_i32_0 = arith.constant 0 : i32
    %2 = arith.cmpi ne, %1, %c0_i32_0 : i32
    scf.if %2 {
      %cst_10 = arith.constant 0.000000e+00 : f32
      %12 = vector.broadcast %cst_10 : f32 to vector<32x32xf32>
      %c0_11 = arith.constant 0 : index
      %c0_12 = arith.constant 0 : index
      %13 = vector.load %arg9[%c0_11, %c0_12] : memref<32x32xf32, #tpu.memory_space<vmem>>, vector<32x32xf32>
      tpu.vector_store %arg9[%c0_11, %c0_12], %12 {strides = array<i32>} : memref<32x32xf32, #tpu.memory_space<vmem>>, vector<32x32xf32>,
    } else {
    }
    %c0 = arith.constant 0 : index
    %c0_1 = arith.constant 0 : index
    %3 = vector.load %arg9[%c0, %c0_1] : memref<32x32xf32, #tpu.memory_space<vmem>>, vector<32x32xf32>
    %c0_2 = arith.constant 0 : index
    %c0_3 = arith.constant 0 : index
    %4 = vector.load %arg2[%c0_2, %c0_3] : memref<32x32xbf16, #tpu.memory_space<vmem>>, vector<32x32xbf16>
    %c0_4 = arith.constant 0 : index
    %c0_5 = arith.constant 0 : index
    %5 = vector.load %arg3[%c0_4, %c0_5] : memref<32x32xbf16, #tpu.memory_space<vmem>>, vector<32x32xbf16>
    %cst = arith.constant dense<0.000000e+00> : vector<32x32xf32>
    %6 = tpu.matmul %4, %5, %cst {dimension_numbers = #tpu.dot_dimension_numbers<[1], [0], [0], [1], [0, 0, 1, 1], [], []>} : vector<32x32xbf16>, vector<32x32xbf16>, vector<32x32xf32> -> vector<32x32xf32>
    %7 = arith.addf %3, %6 : vector<32x32xf32>
    %c0_6 = arith.constant 0 : index
    %c0_7 = arith.constant 0 : index
    %8 = vector.load %arg9[%c0_6, %c0_7] : memref<32x32xf32, #tpu.memory_space<vmem>>, vector<32x32xf32>
    tpu.vector_store %arg9[%c0_6, %c0_7], %7 {strides = array<i32>} : memref<32x32xf32, #tpu.memory_space<vmem>>, vector<32x32xf32>,
    %c0_i32_8 = arith.constant 0 : i32
    %9 = arith.cmpi eq, %arg1, %c0_i32_8 : i32
    %10 = arith.extui %9 : i1 to i32
    %c0_i32_9 = arith.constant 0 : i32
    %11 = arith.cmpi ne, %10, %c0_i32_9 : i32
    scf.if %11 {
      %c0_10 = arith.constant 0 : index
      %c0_11 = arith.constant 0 : index
      %12 = vector.load %arg9[%c0_10, %c0_11] : memref<32x32xf32, #tpu.memory_space<vmem>>, vector<32x32xf32>
      %c0_12 = arith.constant 0 : index
      %c0_13 = arith.constant 0 : index
      %13 = vector.load %arg4[%c0_12, %c0_13] : memref<1x32xf32, #tpu.memory_space<vmem>>, vector<1x32xf32>
      %14 = vector.broadcast %13 : vector<1x32xf32> to vector<32x32xf32>
      %15 = arith.addf %12, %14 : vector<32x32xf32>
      %c0_14 = arith.constant 0 : index
      %c0_15 = arith.constant 0 : index
      %16 = vector.load %arg5[%c0_14, %c0_15] : memref<32x32xbf16, #tpu.memory_space<vmem>>, vector<32x32xbf16>
      %17 = arith.extf %16 : vector<32x32xbf16> to vector<32x32xf32>
      %18 = arith.addf %15, %17 : vector<32x32xf32>
      %cst_16 = arith.constant dense<0.000000e+00> : vector<32xf32>
      %19 = vector.multi_reduction <add>, %18, %cst_16 [1] : vector<32x32xf32> to vector<32xf32>
      %20 = vector.shape_cast %19 : vector<32xf32> to vector<32x1xf32>
      %cst_17 = arith.constant 3.200000e+01 : f32
      %21 = vector.broadcast %cst_17 : f32 to vector<32x1xf32>
      %22 = arith.divf %20, %21 : vector<32x1xf32>
      %23 = vector.broadcast %22 : vector<32x1xf32> to vector<32x32xf32>
      %24 = arith.subf %18, %23 : vector<32x32xf32>
      %25 = arith.mulf %24, %24 : vector<32x32xf32>
      %cst_18 = arith.constant dense<0.000000e+00> : vector<32xf32>
      %26 = vector.multi_reduction <add>, %25, %cst_18 [1] : vector<32x32xf32> to vector<32xf32>
      %27 = vector.shape_cast %26 : vector<32xf32> to vector<32x1xf32>
      %cst_19 = arith.constant 3.200000e+01 : f32
      %28 = vector.broadcast %cst_19 : f32 to vector<32x1xf32>
      %29 = arith.divf %27, %28 : vector<32x1xf32>
      %cst_20 = arith.constant 9.99999996E-13 : f32
      %30 = vector.broadcast %cst_20 : f32 to vector<32x1xf32>
      %31 = arith.addf %29, %30 : vector<32x1xf32>
      %32 = math.rsqrt %31 : vector<32x1xf32>
      %33 = vector.broadcast %32 : vector<32x1xf32> to vector<32x32xf32>
      %34 = arith.mulf %24, %33 : vector<32x32xf32>
      %c0_21 = arith.constant 0 : index
      %c0_22 = arith.constant 0 : index
      %35 = vector.load %arg6[%c0_21, %c0_22] : memref<1x32xf32, #tpu.memory_space<vmem>>, vector<1x32xf32>
      %36 = vector.broadcast %35 : vector<1x32xf32> to vector<32x32xf32>
      %37 = arith.mulf %34, %36 : vector<32x32xf32>
      %c0_23 = arith.constant 0 : index
      %c0_24 = arith.constant 0 : index
      %38 = vector.load %arg7[%c0_23, %c0_24] : memref<1x32xf32, #tpu.memory_space<vmem>>, vector<1x32xf32>
      %39 = vector.broadcast %38 : vector<1x32xf32> to vector<32x32xf32>
      %40 = arith.addf %37, %39 : vector<32x32xf32>
      %41 = arith.truncf %40 : vector<32x32xf32> to vector<32x32xbf16>
      %c0_25 = arith.constant 0 : index
      %c0_26 = arith.constant 0 : index
      %42 = vector.load %arg8[%c0_25, %c0_26] : memref<32x32xbf16, #tpu.memory_space<vmem>>, vector<32x32xbf16>
      tpu.vector_store %arg8[%c0_25, %c0_26], %41 {strides = array<i32>} : memref<32x32xbf16, #tpu.memory_space<vmem>>, vector<32x32xbf16>,
    } else {
    }
    return
  }
  func.func @transform_0(%arg0: i32, %arg1: i32) -> (i32, i32) {
    %c0_i32 = arith.constant 0 : i32
    return %arg0, %arg1 : i32, i32
  }
  func.func @transform_1(%arg0: i32, %arg1: i32) -> (i32, i32) {
    %c0_i32 = arith.constant 0 : i32
    %c0_i32_0 = arith.constant 0 : i32
    return %arg1, %c0_i32 : i32, i32
  }
  func.func @transform_2(%arg0: i32, %arg1: i32) -> (i32, i32) {
    %c0_i32 = arith.constant 0 : i32
    %c0_i32_0 = arith.constant 0 : i32
    %c0_i32_1 = arith.constant 0 : i32
    return %c0_i32, %c0_i32_0 : i32, i32
  }
  func.func @transform_3(%arg0: i32, %arg1: i32) -> (i32, i32) {
    %c0_i32 = arith.constant 0 : i32
    %c0_i32_0 = arith.constant 0 : i32
    return %arg0, %c0_i32 : i32, i32
  }
  func.func @transform_4(%arg0: i32, %arg1: i32) -> (i32, i32) {
    %c0_i32 = arith.constant 0 : i32
    %c0_i32_0 = arith.constant 0 : i32
    %c0_i32_1 = arith.constant 0 : i32
    return %c0_i32, %c0_i32_0 : i32, i32
  }
  func.func @transform_5(%arg0: i32, %arg1: i32) -> (i32, i32) {
    %c0_i32 = arith.constant 0 : i32
    %c0_i32_0 = arith.constant 0 : i32
    %c0_i32_1 = arith.constant 0 : i32
    return %c0_i32, %c0_i32_0 : i32, i32
  }
  func.func @transform_6(%arg0: i32, %arg1: i32) -> (i32, i32) {
    %c0_i32 = arith.constant 0 : i32
    %c0_i32_0 = arith.constant 0 : i32
    return %arg0, %c0_i32 : i32, i32
  }
}

module attributes {stable_mosaic.version = 11 : i64} {
  func.func @_dense_kernel(%arg0: i32, %arg1: i32, %arg2: i32, %arg3: memref<32x32xbf16, #tpu.memory_space<vmem>>, %arg4: memref<32x64xbf16, #tpu.memory_space<vmem>>, %arg5: memref<1x64xf32, #tpu.memory_space<vmem>>, %arg6: memref<32x64xbf16, #tpu.memory_space<vmem>>, %arg7: memref<32x64xf32, #tpu.memory_space<vmem>>) attributes {dimension_semantics = [#tpu.dimension_semantics<parallel>, #tpu.dimension_semantics<parallel>, #tpu.dimension_semantics<arbitrary>], iteration_bounds = array<i64: 1, 1, 1>, scalar_prefetch = 0 : i64, scratch_operands = 1 : i64, tpu.core_type = #tpu.core_type<tc>, window_params = [{transform_indices = @transform_0, window_bounds = array<i64: 32, 32>}, {transform_indices = @transform_1, window_bounds = array<i64: 32, 64>}, {transform_indices = @transform_2, window_bounds = array<i64: 1, 64>}, {transform_indices = @transform_3, window_bounds = array<i64: 32, 64>}]} {
    %c0_i32 = arith.constant 0 : i32
    %0 = arith.cmpi eq, %arg2, %c0_i32 : i32
    %1 = arith.extui %0 : i1 to i32
    %c0_i32_0 = arith.constant 0 : i32
    %2 = arith.cmpi ne, %1, %c0_i32_0 : i32
    scf.if %2 {
      %cst_10 = arith.constant 0.000000e+00 : f32
      %12 = vector.broadcast %cst_10 : f32 to vector<32x64xf32>
      %c0_11 = arith.constant 0 : index
      %c0_12 = arith.constant 0 : index
      %13 = vector.load %arg7[%c0_11, %c0_12] : memref<32x64xf32, #tpu.memory_space<vmem>>, vector<32x64xf32>
      tpu.vector_store %arg7[%c0_11, %c0_12], %12 {strides = array<i32>} : memref<32x64xf32, #tpu.memory_space<vmem>>, vector<32x64xf32>,
    } else {
    }
    %c0 = arith.constant 0 : index
    %c0_1 = arith.constant 0 : index
    %3 = vector.load %arg7[%c0, %c0_1] : memref<32x64xf32, #tpu.memory_space<vmem>>, vector<32x64xf32>
    %c0_2 = arith.constant 0 : index
    %c0_3 = arith.constant 0 : index
    %4 = vector.load %arg3[%c0_2, %c0_3] : memref<32x32xbf16, #tpu.memory_space<vmem>>, vector<32x32xbf16>
    %c0_4 = arith.constant 0 : index
    %c0_5 = arith.constant 0 : index
    %5 = vector.load %arg4[%c0_4, %c0_5] : memref<32x64xbf16, #tpu.memory_space<vmem>>, vector<32x64xbf16>
    %cst = arith.constant dense<0.000000e+00> : vector<32x64xf32>
    %6 = tpu.matmul %4, %5, %cst {dimension_numbers = #tpu.dot_dimension_numbers<[1], [0], [0], [1], [0, 0, 1, 1], [], []>} : vector<32x32xbf16>, vector<32x64xbf16>, vector<32x64xf32> -> vector<32x64xf32>
    %7 = arith.addf %3, %6 : vector<32x64xf32>
    %c0_6 = arith.constant 0 : index
    %c0_7 = arith.constant 0 : index
    %8 = vector.load %arg7[%c0_6, %c0_7] : memref<32x64xf32, #tpu.memory_space<vmem>>, vector<32x64xf32>
    tpu.vector_store %arg7[%c0_6, %c0_7], %7 {strides = array<i32>} : memref<32x64xf32, #tpu.memory_space<vmem>>, vector<32x64xf32>,
    %c0_i32_8 = arith.constant 0 : i32
    %9 = arith.cmpi eq, %arg2, %c0_i32_8 : i32
    %10 = arith.extui %9 : i1 to i32
    %c0_i32_9 = arith.constant 0 : i32
    %11 = arith.cmpi ne, %10, %c0_i32_9 : i32
    scf.if %11 {
      %c0_10 = arith.constant 0 : index
      %c0_11 = arith.constant 0 : index
      %12 = vector.load %arg7[%c0_10, %c0_11] : memref<32x64xf32, #tpu.memory_space<vmem>>, vector<32x64xf32>
      %c0_12 = arith.constant 0 : index
      %c0_13 = arith.constant 0 : index
      %13 = vector.load %arg5[%c0_12, %c0_13] : memref<1x64xf32, #tpu.memory_space<vmem>>, vector<1x64xf32>
      %14 = vector.broadcast %13 : vector<1x64xf32> to vector<32x64xf32>
      %15 = arith.addf %12, %14 : vector<32x64xf32>
      %cst_14 = arith.constant 5.000000e-01 : f32
      %16 = vector.broadcast %cst_14 : f32 to vector<32x64xf32>
      %17 = arith.mulf %16, %15 : vector<32x64xf32>
      %cst_15 = arith.constant 4.471500e-02 : f32
      %18 = vector.broadcast %cst_15 : f32 to vector<32x64xf32>
      %19 = arith.mulf %18, %15 : vector<32x64xf32>
      %20 = arith.mulf %19, %15 : vector<32x64xf32>
      %21 = arith.mulf %20, %15 : vector<32x64xf32>
      %22 = arith.addf %15, %21 : vector<32x64xf32>
      %cst_16 = arith.constant 0.797884583 : f32
      %23 = vector.broadcast %cst_16 : f32 to vector<32x64xf32>
      %24 = arith.mulf %23, %22 : vector<32x64xf32>
      %25 = math.tanh %24 : vector<32x64xf32>
      %cst_17 = arith.constant 1.000000e+00 : f32
      %26 = vector.broadcast %cst_17 : f32 to vector<32x64xf32>
      %27 = arith.addf %26, %25 : vector<32x64xf32>
      %28 = arith.mulf %17, %27 : vector<32x64xf32>
      %29 = arith.truncf %28 : vector<32x64xf32> to vector<32x64xbf16>
      %c0_18 = arith.constant 0 : index
      %c0_19 = arith.constant 0 : index
      %30 = vector.load %arg6[%c0_18, %c0_19] : memref<32x64xbf16, #tpu.memory_space<vmem>>, vector<32x64xbf16>
      tpu.vector_store %arg6[%c0_18, %c0_19], %29 {strides = array<i32>} : memref<32x64xbf16, #tpu.memory_space<vmem>>, vector<32x64xbf16>,
    } else {
    }
    return
  }
  func.func @transform_0(%arg0: i32, %arg1: i32, %arg2: i32) -> (i32, i32) {
    %c0_i32 = arith.constant 0 : i32
    return %arg0, %arg2 : i32, i32
  }
  func.func @transform_1(%arg0: i32, %arg1: i32, %arg2: i32) -> (i32, i32) {
    %c0_i32 = arith.constant 0 : i32
    return %arg2, %arg1 : i32, i32
  }
  func.func @transform_2(%arg0: i32, %arg1: i32, %arg2: i32) -> (i32, i32) {
    %c0_i32 = arith.constant 0 : i32
    %c0_i32_0 = arith.constant 0 : i32
    return %c0_i32, %arg1 : i32, i32
  }
  func.func @transform_3(%arg0: i32, %arg1: i32, %arg2: i32) -> (i32, i32) {
    %c0_i32 = arith.constant 0 : i32
    return %arg0, %arg1 : i32, i32
  }
}

module attributes {stable_mosaic.version = 11 : i64} {
  func.func @_dense_res_ln_kernel(%arg0: i32, %arg1: i32, %arg2: memref<32x64xbf16, #tpu.memory_space<vmem>>, %arg3: memref<64x32xbf16, #tpu.memory_space<vmem>>, %arg4: memref<1x32xf32, #tpu.memory_space<vmem>>, %arg5: memref<32x32xbf16, #tpu.memory_space<vmem>>, %arg6: memref<1x32xf32, #tpu.memory_space<vmem>>, %arg7: memref<1x32xf32, #tpu.memory_space<vmem>>, %arg8: memref<32x32xbf16, #tpu.memory_space<vmem>>, %arg9: memref<32x32xf32, #tpu.memory_space<vmem>>) attributes {dimension_semantics = [#tpu.dimension_semantics<parallel>, #tpu.dimension_semantics<arbitrary>], iteration_bounds = array<i64: 1, 1>, scalar_prefetch = 0 : i64, scratch_operands = 1 : i64, tpu.core_type = #tpu.core_type<tc>, window_params = [{transform_indices = @transform_0, window_bounds = array<i64: 32, 64>}, {transform_indices = @transform_1, window_bounds = array<i64: 64, 32>}, {pipeline_mode = #tpu.pipeline_mode<synchronous>, transform_indices = @transform_2, window_bounds = array<i64: 1, 32>}, {transform_indices = @transform_3, window_bounds = array<i64: 32, 32>}, {pipeline_mode = #tpu.pipeline_mode<synchronous>, transform_indices = @transform_4, window_bounds = array<i64: 1, 32>}, {pipeline_mode = #tpu.pipeline_mode<synchronous>, transform_indices = @transform_5, window_bounds = array<i64: 1, 32>}, {transform_indices = @transform_6, window_bounds = array<i64: 32, 32>}]} {
    %c0_i32 = arith.constant 0 : i32
    %0 = arith.cmpi eq, %arg1, %c0_i32 : i32
    %1 = arith.extui %0 : i1 to i32
    %c0_i32_0 = arith.constant 0 : i32
    %2 = arith.cmpi ne, %1, %c0_i32_0 : i32
    scf.if %2 {
      %cst_10 = arith.constant 0.000000e+00 : f32
      %12 = vector.broadcast %cst_10 : f32 to vector<32x32xf32>
      %c0_11 = arith.constant 0 : index
      %c0_12 = arith.constant 0 : index
      %13 = vector.load %arg9[%c0_11, %c0_12] : memref<32x32xf32, #tpu.memory_space<vmem>>, vector<32x32xf32>
      tpu.vector_store %arg9[%c0_11, %c0_12], %12 {strides = array<i32>} : memref<32x32xf32, #tpu.memory_space<vmem>>, vector<32x32xf32>,
    } else {
    }
    %c0 = arith.constant 0 : index
    %c0_1 = arith.constant 0 : index
    %3 = vector.load %arg9[%c0, %c0_1] : memref<32x32xf32, #tpu.memory_space<vmem>>, vector<32x32xf32>
    %c0_2 = arith.constant 0 : index
    %c0_3 = arith.constant 0 : index
    %4 = vector.load %arg2[%c0_2, %c0_3] : memref<32x64xbf16, #tpu.memory_space<vmem>>, vector<32x64xbf16>
    %c0_4 = arith.constant 0 : index
    %c0_5 = arith.constant 0 : index
    %5 = vector.load %arg3[%c0_4, %c0_5] : memref<64x32xbf16, #tpu.memory_space<vmem>>, vector<64x32xbf16>
    %cst = arith.constant dense<0.000000e+00> : vector<32x32xf32>
    %6 = tpu.matmul %4, %5, %cst {dimension_numbers = #tpu.dot_dimension_numbers<[1], [0], [0], [1], [0, 0, 1, 1], [], []>} : vector<32x64xbf16>, vector<64x32xbf16>, vector<32x32xf32> -> vector<32x32xf32>
    %7 = arith.addf %3, %6 : vector<32x32xf32>
    %c0_6 = arith.constant 0 : index
    %c0_7 = arith.constant 0 : index
    %8 = vector.load %arg9[%c0_6, %c0_7] : memref<32x32xf32, #tpu.memory_space<vmem>>, vector<32x32xf32>
    tpu.vector_store %arg9[%c0_6, %c0_7], %7 {strides = array<i32>} : memref<32x32xf32, #tpu.memory_space<vmem>>, vector<32x32xf32>,
    %c0_i32_8 = arith.constant 0 : i32
    %9 = arith.cmpi eq, %arg1, %c0_i32_8 : i32
    %10 = arith.extui %9 : i1 to i32
    %c0_i32_9 = arith.constant 0 : i32
    %11 = arith.cmpi ne, %10, %c0_i32_9 : i32
    scf.if %11 {
      %c0_10 = arith.constant 0 : index
      %c0_11 = arith.constant 0 : index
      %12 = vector.load %arg9[%c0_10, %c0_11] : memref<32x32xf32, #tpu.memory_space<vmem>>, vector<32x32xf32>
      %c0_12 = arith.constant 0 : index
      %c0_13 = arith.constant 0 : index
      %13 = vector.load %arg4[%c0_12, %c0_13] : memref<1x32xf32, #tpu.memory_space<vmem>>, vector<1x32xf32>
      %14 = vector.broadcast %13 : vector<1x32xf32> to vector<32x32xf32>
      %15 = arith.addf %12, %14 : vector<32x32xf32>
      %c0_14 = arith.constant 0 : index
      %c0_15 = arith.constant 0 : index
      %16 = vector.load %arg5[%c0_14, %c0_15] : memref<32x32xbf16, #tpu.memory_space<vmem>>, vector<32x32xbf16>
      %17 = arith.extf %16 : vector<32x32xbf16> to vector<32x32xf32>
      %18 = arith.addf %15, %17 : vector<32x32xf32>
      %cst_16 = arith.constant dense<0.000000e+00> : vector<32xf32>
      %19 = vector.multi_reduction <add>, %18, %cst_16 [1] : vector<32x32xf32> to vector<32xf32>
      %20 = vector.shape_cast %19 : vector<32xf32> to vector<32x1xf32>
      %cst_17 = arith.constant 3.200000e+01 : f32
      %21 = vector.broadcast %cst_17 : f32 to vector<32x1xf32>
      %22 = arith.divf %20, %21 : vector<32x1xf32>
      %23 = vector.broadcast %22 : vector<32x1xf32> to vector<32x32xf32>
      %24 = arith.subf %18, %23 : vector<32x32xf32>
      %25 = arith.mulf %24, %24 : vector<32x32xf32>
      %cst_18 = arith.constant dense<0.000000e+00> : vector<32xf32>
      %26 = vector.multi_reduction <add>, %25, %cst_18 [1] : vector<32x32xf32> to vector<32xf32>
      %27 = vector.shape_cast %26 : vector<32xf32> to vector<32x1xf32>
      %cst_19 = arith.constant 3.200000e+01 : f32
      %28 = vector.broadcast %cst_19 : f32 to vector<32x1xf32>
      %29 = arith.divf %27, %28 : vector<32x1xf32>
      %cst_20 = arith.constant 9.99999996E-13 : f32
      %30 = vector.broadcast %cst_20 : f32 to vector<32x1xf32>
      %31 = arith.addf %29, %30 : vector<32x1xf32>
      %32 = math.rsqrt %31 : vector<32x1xf32>
      %33 = vector.broadcast %32 : vector<32x1xf32> to vector<32x32xf32>
      %34 = arith.mulf %24, %33 : vector<32x32xf32>
      %c0_21 = arith.constant 0 : index
      %c0_22 = arith.constant 0 : index
      %35 = vector.load %arg6[%c0_21, %c0_22] : memref<1x32xf32, #tpu.memory_space<vmem>>, vector<1x32xf32>
      %36 = vector.broadcast %35 : vector<1x32xf32> to vector<32x32xf32>
      %37 = arith.mulf %34, %36 : vector<32x32xf32>
      %c0_23 = arith.constant 0 : index
      %c0_24 = arith.constant 0 : index
      %38 = vector.load %arg7[%c0_23, %c0_24] : memref<1x32xf32, #tpu.memory_space<vmem>>, vector<1x32xf32>
      %39 = vector.broadcast %38 : vector<1x32xf32> to vector<32x32xf32>
      %40 = arith.addf %37, %39 : vector<32x32xf32>
      %41 = arith.truncf %40 : vector<32x32xf32> to vector<32x32xbf16>
      %c0_25 = arith.constant 0 : index
      %c0_26 = arith.constant 0 : index
      %42 = vector.load %arg8[%c0_25, %c0_26] : memref<32x32xbf16, #tpu.memory_space<vmem>>, vector<32x32xbf16>
      tpu.vector_store %arg8[%c0_25, %c0_26], %41 {strides = array<i32>} : memref<32x32xbf16, #tpu.memory_space<vmem>>, vector<32x32xbf16>,
    } else {
    }
    return
  }
  func.func @transform_0(%arg0: i32, %arg1: i32) -> (i32, i32) {
    %c0_i32 = arith.constant 0 : i32
    return %arg0, %arg1 : i32, i32
  }
  func.func @transform_1(%arg0: i32, %arg1: i32) -> (i32, i32) {
    %c0_i32 = arith.constant 0 : i32
    %c0_i32_0 = arith.constant 0 : i32
    return %arg1, %c0_i32 : i32, i32
  }
  func.func @transform_2(%arg0: i32, %arg1: i32) -> (i32, i32) {
    %c0_i32 = arith.constant 0 : i32
    %c0_i32_0 = arith.constant 0 : i32
    %c0_i32_1 = arith.constant 0 : i32
    return %c0_i32, %c0_i32_0 : i32, i32
  }
  func.func @transform_3(%arg0: i32, %arg1: i32) -> (i32, i32) {
    %c0_i32 = arith.constant 0 : i32
    %c0_i32_0 = arith.constant 0 : i32
    return %arg0, %c0_i32 : i32, i32
  }
  func.func @transform_4(%arg0: i32, %arg1: i32) -> (i32, i32) {
    %c0_i32 = arith.constant 0 : i32
    %c0_i32_0 = arith.constant 0 : i32
    %c0_i32_1 = arith.constant 0 : i32
    return %c0_i32, %c0_i32_0 : i32, i32
  }
  func.func @transform_5(%arg0: i32, %arg1: i32) -> (i32, i32) {
    %c0_i32 = arith.constant 0 : i32
    %c0_i32_0 = arith.constant 0 : i32
    %c0_i32_1 = arith.constant 0 : i32
    return %c0_i32, %c0_i32_0 : i32, i32
  }
  func.func @transform_6(%arg0: i32, %arg1: i32) -> (i32, i32) {
    %c0_i32 = arith.constant 0 : i32
    %c0_i32_0 = arith.constant 0 : i32
    return %arg0, %c0_i32 : i32, i32
  }
}

module attributes {stable_mosaic.version = 11 : i64} {
  func.func @_pool_head_kernel(%arg0: i32, %arg1: memref<2x32xbf16, #tpu.memory_space<vmem>>, %arg2: memref<32x32xbf16, #tpu.memory_space<vmem>>, %arg3: memref<1x32xf32, #tpu.memory_space<vmem>>, %arg4: memref<32x128xbf16, #tpu.memory_space<vmem>>, %arg5: memref<1x128xf32, #tpu.memory_space<vmem>>, %arg6: memref<2x128xf32, #tpu.memory_space<vmem>>) attributes {dimension_semantics = [#tpu.dimension_semantics<arbitrary>], iteration_bounds = array<i64: 1>, scalar_prefetch = 0 : i64, scratch_operands = 0 : i64, tpu.core_type = #tpu.core_type<tc>, window_params = [{pipeline_mode = #tpu.pipeline_mode<synchronous>, transform_indices = @transform_0, window_bounds = array<i64: 2, 32>}, {pipeline_mode = #tpu.pipeline_mode<synchronous>, transform_indices = @transform_1, window_bounds = array<i64: 32, 32>}, {pipeline_mode = #tpu.pipeline_mode<synchronous>, transform_indices = @transform_2, window_bounds = array<i64: 1, 32>}, {pipeline_mode = #tpu.pipeline_mode<synchronous>, transform_indices = @transform_3, window_bounds = array<i64: 32, 128>}, {pipeline_mode = #tpu.pipeline_mode<synchronous>, transform_indices = @transform_4, window_bounds = array<i64: 1, 128>}, {pipeline_mode = #tpu.pipeline_mode<synchronous>, transform_indices = @transform_5, window_bounds = array<i64: 2, 128>}]} {
    %c0 = arith.constant 0 : index
    %c0_0 = arith.constant 0 : index
    %0 = vector.load %arg1[%c0, %c0_0] : memref<2x32xbf16, #tpu.memory_space<vmem>>, vector<2x32xbf16>
    %c0_1 = arith.constant 0 : index
    %c0_2 = arith.constant 0 : index
    %1 = vector.load %arg2[%c0_1, %c0_2] : memref<32x32xbf16, #tpu.memory_space<vmem>>, vector<32x32xbf16>
    %cst = arith.constant dense<0.000000e+00> : vector<2x32xf32>
    %2 = tpu.matmul %0, %1, %cst {dimension_numbers = #tpu.dot_dimension_numbers<[1], [0], [0], [1], [0, 0, 1, 1], [], []>} : vector<2x32xbf16>, vector<32x32xbf16>, vector<2x32xf32> -> vector<2x32xf32>
    %c0_3 = arith.constant 0 : index
    %c0_4 = arith.constant 0 : index
    %3 = vector.load %arg3[%c0_3, %c0_4] : memref<1x32xf32, #tpu.memory_space<vmem>>, vector<1x32xf32>
    %4 = vector.broadcast %3 : vector<1x32xf32> to vector<2x32xf32>
    %5 = arith.addf %2, %4 : vector<2x32xf32>
    %6 = math.tanh %5 : vector<2x32xf32>
    %7 = arith.truncf %6 : vector<2x32xf32> to vector<2x32xbf16>
    %c0_5 = arith.constant 0 : index
    %c0_6 = arith.constant 0 : index
    %8 = vector.load %arg4[%c0_5, %c0_6] : memref<32x128xbf16, #tpu.memory_space<vmem>>, vector<32x128xbf16>
    %cst_7 = arith.constant dense<0.000000e+00> : vector<2x128xf32>
    %9 = tpu.matmul %7, %8, %cst_7 {dimension_numbers = #tpu.dot_dimension_numbers<[1], [0], [0], [1], [0, 0, 1, 1], [], []>} : vector<2x32xbf16>, vector<32x128xbf16>, vector<2x128xf32> -> vector<2x128xf32>
    %c0_8 = arith.constant 0 : index
    %c0_9 = arith.constant 0 : index
    %10 = vector.load %arg5[%c0_8, %c0_9] : memref<1x128xf32, #tpu.memory_space<vmem>>, vector<1x128xf32>
    %11 = vector.broadcast %10 : vector<1x128xf32> to vector<2x128xf32>
    %12 = arith.addf %9, %11 : vector<2x128xf32>
    %c0_10 = arith.constant 0 : index
    %c0_11 = arith.constant 0 : index
    %13 = vector.load %arg6[%c0_10, %c0_11] : memref<2x128xf32, #tpu.memory_space<vmem>>, vector<2x128xf32>
    tpu.vector_store %arg6[%c0_10, %c0_11], %12 {strides = array<i32>} : memref<2x128xf32, #tpu.memory_space<vmem>>, vector<2x128xf32>,
    return
  }
  func.func @transform_0(%arg0: i32) -> (i32, i32) {
    %c0_i32 = arith.constant 0 : i32
    %c0_i32_0 = arith.constant 0 : i32
    %c0_i32_1 = arith.constant 0 : i32
    return %c0_i32, %c0_i32_0 : i32, i32
  }
  func.func @transform_1(%arg0: i32) -> (i32, i32) {
    %c0_i32 = arith.constant 0 : i32
    %c0_i32_0 = arith.constant 0 : i32
    %c0_i32_1 = arith.constant 0 : i32
    return %c0_i32, %c0_i32_0 : i32, i32
  }
  func.func @transform_2(%arg0: i32) -> (i32, i32) {
    %c0_i32 = arith.constant 0 : i32
    %c0_i32_0 = arith.constant 0 : i32
    %c0_i32_1 = arith.constant 0 : i32
    return %c0_i32, %c0_i32_0 : i32, i32
  }
  func.func @transform_3(%arg0: i32) -> (i32, i32) {
    %c0_i32 = arith.constant 0 : i32
    %c0_i32_0 = arith.constant 0 : i32
    %c0_i32_1 = arith.constant 0 : i32
    return %c0_i32, %c0_i32_0 : i32, i32
  }
  func.func @transform_4(%arg0: i32) -> (i32, i32) {
    %c0_i32 = arith.constant 0 : i32
    %c0_i32_0 = arith.constant 0 : i32
    %c0_i32_1 = arith.constant 0 : i32
    return %c0_i32, %c0_i32_0 : i32, i32
  }
  func.func @transform_5(%arg0: i32) -> (i32, i32) {
    %c0_i32 = arith.constant 0 : i32
    %c0_i32_0 = arith.constant 0 : i32
    %c0_i32_1 = arith.constant 0 : i32
    return %c0_i32, %c0_i32_0 : i32, i32
  }
}

</mosaic_0001>

<llo_original>
// kernel: bert_classifier_forward.12
$region0: #{bert_classifier_forward.12}
  #allocation0 [shape = 'u32[]', space=smem, size = 0x4, offset = 0x4, fixed_abs, tag = 'smem constant byte address 0x4 - core index']
  #allocation1 [shape = 'u32[72,128]{1,0:T(1,128)}', space=vmem, size = 0x9000, scoped, tag = 'internal scratch']
  %s0 = inlined_call_operand.vmem [shape: f32[32,32], index: 0, kind: input, shape index: {}]
  %s1 = inlined_call_operand.vmem [shape: f32[1,32], index: 1, kind: input, shape index: {}]
  %s2 = inlined_call_operand.vmem [shape: f32[1,32], index: 2, kind: input, shape index: {}]
  %s3 = inlined_call_operand.vmem [shape: bf16[32,32], index: 3, kind: output, shape index: {}]
  %s4 = sld [smem:[#allocation0]]
  $region22: #{bert_classifier_forward.12} parent=0
    _
  %s6 = ssub.s32 1, %s4
  %s7 = scalar_select 0, %s6, %s4
  // Predicated region
  $region2: #{bert_classifier_forward.12} parent=0 // pred_check
    _
  $region3: #{bert_classifier_forward.12} parent=0 // pred_check_branch
    %9 = sbr.rel (0) target = $region5
  $region4: #{bert_classifier_forward.12} parent=0 // pred_region
    _
  $region5: #{bert_classifier_forward.12} parent=0 // pred_fallthru
    _
  // Predicated region
  $region6: #{bert_classifier_forward.12} parent=0 // pred_check
    _
  $region7: #{bert_classifier_forward.12} parent=0 // pred_check_branch
    %11 = sbr.rel (0) target = $region9
  $region8: #{bert_classifier_forward.12} parent=0 // pred_region
    _
  $region9: #{bert_classifier_forward.12} parent=0 // pred_fallthru
    _
  // Predicated region
  $region10: #{bert_classifier_forward.12} parent=0 // pred_check
    _
  $region11: #{bert_classifier_forward.12} parent=0 // pred_check_branch
    %13 = sbr.rel (0) target = $region13
  $region12: #{bert_classifier_forward.12} parent=0 // pred_region
    _
  $region13: #{bert_classifier_forward.12} parent=0 // pred_fallthru
    _
  %v14 = vld [vmem:[%s0] sm:$0xff]
  %v15 = vld [vmem:[%s0 + $0x8] sm:$0xff]
  %v16 = vld [vmem:[%s0 + $0x10] sm:$0xff]
  %v17 = vld [vmem:[%s0 + $0x18] sm:$0xff]
  %vm18 = vcmask 261120
  %v19 = vsel %vm18, %v14, 0.0
  %20 = vadd.xlane.f32.xlu0 %v19
  %v21 = vpop.xlane.xlu0 %20
  %v22 = vsel %vm18, %v15, 0.0
  %23 = vadd.xlane.f32.xlu0 %v22
  %v24 = vpop.xlane.xlu0 %23
  %v25 = vsel %vm18, %v16, 0.0
  %26 = vadd.xlane.f32.xlu0 %v25
  %v27 = vpop.xlane.xlu0 %26
  %v28 = vsel %vm18, %v17, 0.0
  %29 = vadd.xlane.f32.xlu0 %v28
  %v30 = vpop.xlane.xlu0 %29
  %v31 = vrcp.pop 32.0
  %v32 = vmul.f32 32.0, %v31
  %v33 = vsub.f32 1.0, %v32
  %v34 = vmul.f32 %v31, %v33
  %v35 = vadd.f32 %v31, %v34
  %vm36 = vweird.f32 %v31
  %v37 = vsel %vm36, %v31, %v35
  %v38 = vmul.f32 %v21, %v37
  %v39 = vmul.f32 %v24, %v37
  %v40 = vmul.f32 %v27, %v37
  %v41 = vmul.f32 %v30, %v37
  %v42 = vsub.f32 %v14, %v38
  %v43 = vsub.f32 %v15, %v39
  %v44 = vsub.f32 %v16, %v40
  %v45 = vsub.f32 %v17, %v41
  %v46 = vmul.f32 %v42, %v42
  %v47 = vmul.f32 %v43, %v43
  %v48 = vmul.f32 %v44, %v44
  %v49 = vmul.f32 %v45, %v45
  %v50 = vsel %vm18, %v46, 0.0
  %51 = vadd.xlane.f32.xlu0 %v50
  %v52 = vpop.xlane.xlu0 %51
  %v53 = vsel %vm18, %v47, 0.0
  %54 = vadd.xlane.f32.xlu0 %v53
  %v55 = vpop.xlane.xlu0 %54
  %v56 = vsel %vm18, %v48, 0.0
  %57 = vadd.xlane.f32.xlu0 %v56
  %v58 = vpop.xlane.xlu0 %57
  %v59 = vsel %vm18, %v49, 0.0
  %60 = vadd.xlane.f32.xlu0 %v59
  %v61 = vpop.xlane.xlu0 %60
  %v62 = vmul.f32 %v52, %v37
  %v63 = vmul.f32 %v55, %v37
  %v64 = vmul.f32 %v58, %v37
  %v65 = vmul.f32 %v61, %v37
  %v66 = vadd.f32 %v62, 1e-12
  %v67 = vadd.f32 %v63, 1e-12
  %v68 = vadd.f32 %v64, 1e-12
  %v69 = vadd.f32 %v65, 1e-12
  %v70 = vrsqrt.pop %v66
  %v71 = vmul.f32 %v70, %v66
  %v72 = vmul.f32 %v71, %v70
  %v73 = vmul.f32 0.5, %v72
  %v74 = vsub.f32 1.5, %v73
  %v75 = vmul.f32 %v70, %v74
  %vm76 = vweird.f32 %v66
  %vm77 = vweird.f32 %v70
  %vm78 = vmor %vm76, %vm77
  %v79 = vsel %vm78, %v70, %v75
  %v80 = vrsqrt.pop %v67
  %v81 = vmul.f32 %v80, %v67
  %v82 = vmul.f32 %v81, %v80
  %v83 = vmul.f32 0.5, %v82
  %v84 = vsub.f32 1.5, %v83
  %v85 = vmul.f32 %v80, %v84
  %vm86 = vweird.f32 %v67
  %vm87 = vweird.f32 %v80
  %vm88 = vmor %vm86, %vm87
  %v89 = vsel %vm88, %v80, %v85
  %v90 = vrsqrt.pop %v68
  %v91 = vmul.f32 %v90, %v68
  %v92 = vmul.f32 %v91, %v90
  %v93 = vmul.f32 0.5, %v92
  %v94 = vsub.f32 1.5, %v93
  %v95 = vmul.f32 %v90, %v94
  %vm96 = vweird.f32 %v68
  %vm97 = vweird.f32 %v90
  %vm98 = vmor %vm96, %vm97
  %v99 = vsel %vm98, %v90, %v95
  %v100 = vrsqrt.pop %v69
  %v101 = vmul.f32 %v100, %v69
  %v102 = vmul.f32 %v101, %v100
  %v103 = vmul.f32 0.5, %v102
  %v104 = vsub.f32 1.5, %v103
  %v105 = vmul.f32 %v100, %v104
  %vm106 = vweird.f32 %v69
  %vm107 = vweird.f32 %v100
  %vm108 = vmor %vm106, %vm107
  %v109 = vsel %vm108, %v100, %v105
  %v110 = vmul.f32 %v42, %v79
  %v111 = vmul.f32 %v43, %v89
  %v112 = vmul.f32 %v44, %v99
  %v113 = vmul.f32 %v45, %v109
  %v114 = vld [vmem:[%s1] sm:$0x1]
  %v116 = vperm.slane %v114, 0
  %v118 = vmul.f32 %v110, %v116
  %v119 = vmul.f32 %v111, %v116
  %v120 = vmul.f32 %v112, %v116
  %v121 = vmul.f32 %v113, %v116
  %v122 = vld [vmem:[%s2] sm:$0x1]
  %v124 = vperm.slane %v122, 0
  %v126 = vadd.f32 %v118, %v124
  %v127 = vadd.f32 %v119, %v124
  %v128 = vadd.f32 %v120, %v124
  %v129 = vadd.f32 %v121, %v124
  %v130 = vpack.c.bf16 %v126, %v126
  %v131 = vpack.c.bf16 %v127, %v127
  %v132 = vpack.c.bf16 %v128, %v128
  %v133 = vpack.c.bf16 %v129, %v129
  %vm134 = vcmask 257024
  %135 = vst.msk [vmem:[%s3] sm:$0xf] %vm134, %v130
  %136 = vst.msk [vmem:[%s3 + $0x4] sm:$0xf] %vm134, %v131
  %137 = vst.msk [vmem:[%s3 + $0x8] sm:$0xf] %vm134, %v132
  %138 = vst.msk [vmem:[%s3 + $0xc] sm:$0xf] %vm134, %v133
  // Predicated region
  $region14: #{bert_classifier_forward.12} parent=0 // pred_check
    _
  $region15: #{bert_classifier_forward.12} parent=0 // pred_check_branch
    %140 = sbr.rel (0) target = $region17
  $region16: #{bert_classifier_forward.12} parent=0 // pred_region
    _
  $region17: #{bert_classifier_forward.12} parent=0 // pred_fallthru
    _
  // Predicated region
  $region18: #{bert_classifier_forward.12} parent=0 // pred_check
    _
  $region19: #{bert_classifier_forward.12} parent=0 // pred_check_branch
    %142 = sbr.rel (0) target = $region21
  $region20: #{bert_classifier_forward.12} parent=0 // pred_region
    _
  $region21: #{bert_classifier_forward.12} parent=0 // pred_fallthru
    _

// kernel: bert_classifier_forward.13
$region0: #{bert_classifier_forward.13}
  #allocation0 [shape = 'u32[]', space=smem, size = 0x4, offset = 0x4, fixed_abs, tag = 'smem constant byte address 0x4 - core index']
  #allocation1 [shape = 'u32[72,128]{1,0:T(1,128)}', space=vmem, size = 0x9000, scoped, tag = 'internal scratch']
  #allocation2 [shape = 'f32[32,96]{1,0:T(8,128)}', space=vmem, size = 0x4000, scoped, tag = 'scratch operand']
  %s0 = inlined_call_operand.vmem [shape: bf16[32,32], index: 0, kind: input, shape index: {}]
  %s1 = inlined_call_operand.vmem [shape: bf16[32,96], index: 1, kind: input, shape index: {}]
  %s2 = inlined_call_operand.vmem [shape: f32[1,96], index: 2, kind: input, shape index: {}]
  %s3 = inlined_call_operand.vmem [shape: bf16[32,96], index: 3, kind: output, shape index: {}]
  %s4 = sld [smem:[#allocation0]]
  $region30: #{bert_classifier_forward.13} parent=0
    _
  %s6 = ssub.s32 1, %s4
  %s7 = scalar_select 0, %s6, %s4
  // Predicated region
  $region2: #{bert_classifier_forward.13} parent=0 // pred_check
    _
  $region3: #{bert_classifier_forward.13} parent=0 // pred_check_branch
    %9 = sbr.rel (0) target = $region5
  $region4: #{bert_classifier_forward.13} parent=0 // pred_region
    _
  $region5: #{bert_classifier_forward.13} parent=0 // pred_fallthru
    _
  // Predicated region
  $region6: #{bert_classifier_forward.13} parent=0 // pred_check
    _
  $region7: #{bert_classifier_forward.13} parent=0 // pred_check_branch
    %11 = sbr.rel (0) target = $region9
  $region8: #{bert_classifier_forward.13} parent=0 // pred_region
    _
  $region9: #{bert_classifier_forward.13} parent=0 // pred_fallthru
    _
  // Predicated region
  $region10: #{bert_classifier_forward.13} parent=0 // pred_check
    _
  $region11: #{bert_classifier_forward.13} parent=0 // pred_check_branch
    %13 = sbr.rel (0) target = $region13
  $region12: #{bert_classifier_forward.13} parent=0 // pred_region
    _
  $region13: #{bert_classifier_forward.13} parent=0 // pred_fallthru
    _
  %p15 = scmp.eq.s32.totalorder 0, 0
  // Predicated region
  $region14: #{bert_classifier_forward.13} parent=0 // pred_check
    %p16 = pneg %p15
  $region15: #{bert_classifier_forward.13} parent=0 // pred_check_branch
    %18 = sbr.rel (%p16) target = $region17
  $region16: #{bert_classifier_forward.13} parent=0 // pred_region
    %vm19 = vcmask 785408
    %20 = vst.msk [vmem:[#allocation2] sm:$0xff] %vm19, 0.0
    %21 = vst.msk [vmem:[#allocation2 + $0x8] sm:$0xff] %vm19, 0.0
    %22 = vst.msk [vmem:[#allocation2 + $0x10] sm:$0xff] %vm19, 0.0
    %23 = vst.msk [vmem:[#allocation2 + $0x18] sm:$0xff] %vm19, 0.0
  $region17: #{bert_classifier_forward.13} parent=0 // pred_fallthru
    _
  %v24 = vld [vmem:[#allocation2] sm:$0xff]
  %v25 = vld [vmem:[#allocation2 + $0x8] sm:$0xff]
  %v26 = vld [vmem:[#allocation2 + $0x10] sm:$0xff]
  %v27 = vld [vmem:[#allocation2 + $0x18] sm:$0xff]
  %v28 = vld [vmem:[%s0] sm:$0xf]
  %v29 = vld [vmem:[%s0 + $0x4] sm:$0xf]
  %v30 = vld [vmem:[%s0 + $0x8] sm:$0xf]
  %v31 = vld [vmem:[%s0 + $0xc] sm:$0xf]
  %v32 = vld [vmem:[%s1] sm:$0xf]
  %v33 = vld [vmem:[%s1 + $0x4] sm:$0xf]
  %v34 = vld [vmem:[%s1 + $0x8] sm:$0xf]
  %v35 = vld [vmem:[%s1 + $0xc] sm:$0xf]
  %v40 = vunpack.c.l.b16 %v28
  %v41 = vunpack.c.l.b16 %v29
  %v42 = vunpack.c.l.b16 %v30
  %v43 = vunpack.c.l.b16 %v31
  %v44 = vpack.c.b16 %v41, %v40
  %v45 = vpack.c.b16 %v43, %v42
  %v50 = vunpack.c.l.b16 %v32
  %v51 = vunpack.c.l.b16 %v33
  %v52 = vunpack.c.l.b16 %v34
  %v53 = vunpack.c.l.b16 %v35
  %v54 = vpack.c.b16 %v51, %v50
  %v55 = vpack.c.b16 %v53, %v52
  %vm58 = vcmask 261120
  %v60 = vsel %vm58, %v44, 0
  %v63 = vsel %vm58, %v45, 0
  %65 = vmatpush.bf16.msra.mxu0 0
  %66 = vmatpush.bf16.msra.mxu0 0
  %67 = vmatpush.bf16.msra.mxu0 0
  %68 = vmatpush.bf16.msra.mxu0 0
  %69 = vmatpush.bf16.msra.mxu0 0
  %70 = vmatpush.bf16.msra.mxu0 0
  %71 = vmatpush.bf16.msra.mxu0 %v55
  %72 = vmatpush.bf16.msra.mxu0 %v54
  %73 = vmatmul.bf16.gmra.mxu0 %v60
  %v74 = vpop.f32.mrf.mxu0
  %v75 = vadd.f32 0.0, %v74
  %v76 = vpop.f32.mrf.mxu0
  %v77 = vadd.f32 0.0, %v76
  %78 = vmatmul.bf16.gmra.mxu0 %v63
  %v79 = vpop.f32.mrf.mxu0
  %v80 = vadd.f32 0.0, %v79
  %v81 = vpop.f32.mrf.mxu0
  %v82 = vadd.f32 0.0, %v81
  %83 = vdwg.mxu0
  %v84 = vadd.f32 %v24, %v75
  %v85 = vadd.f32 %v25, %v77
  %v86 = vadd.f32 %v26, %v80
  %v87 = vadd.f32 %v27, %v82
  %vm88 = vcmask 785408
  %89 = vst.msk [vmem:[#allocation2] sm:$0xff] %vm88, %v84
  %90 = vst.msk [vmem:[#allocation2 + $0x8] sm:$0xff] %vm88, %v85
  %91 = vst.msk [vmem:[#allocation2 + $0x10] sm:$0xff] %vm88, %v86
  %92 = vst.msk [vmem:[#allocation2 + $0x18] sm:$0xff] %vm88, %v87
  // Predicated region
  $region18: #{bert_classifier_forward.13} parent=0 // pred_check
    %p93 = pneg %p15
  $region19: #{bert_classifier_forward.13} parent=0 // pred_check_branch
    %95 = sbr.rel (%p93) target = $region21
  $region20: #{bert_classifier_forward.13} parent=0 // pred_region
    %v96 = vld [vmem:[#allocation2] sm:$0xff]
    %v97 = vld [vmem:[#allocation2 + $0x8] sm:$0xff]
    %v98 = vld [vmem:[#allocation2 + $0x10] sm:$0xff]
    %v99 = vld [vmem:[#allocation2 + $0x18] sm:$0xff]
    %v100 = vld [vmem:[%s2] sm:$0x1]
    %v102 = vperm.slane %v100, 0
    %v104 = vadd.f32 %v96, %v102
    %v105 = vadd.f32 %v97, %v102
    %v106 = vadd.f32 %v98, %v102
    %v107 = vadd.f32 %v99, %v102
    %v108 = vpack.c.bf16 %v104, %v104
    %v109 = vpack.c.bf16 %v105, %v105
    %v110 = vpack.c.bf16 %v106, %v106
    %v111 = vpack.c.bf16 %v107, %v107
    %vm112 = vcmask 781312
    %113 = vst.msk [vmem:[%s3] sm:$0xf] %vm112, %v108
    %114 = vst.msk [vmem:[%s3 + $0x4] sm:$0xf] %vm112, %v109
    %115 = vst.msk [vmem:[%s3 + $0x8] sm:$0xf] %vm112, %v110
    %116 = vst.msk [vmem:[%s3 + $0xc] sm:$0xf] %vm112, %v111
  $region21: #{bert_classifier_forward.13} parent=0 // pred_fallthru
    _
  // Predicated region
  $region22: #{bert_classifier_forward.13} parent=0 // pred_check
    _
  $region23: #{bert_classifier_forward.13} parent=0 // pred_check_branch
    %118 = sbr.rel (0) target = $region25
  $region24: #{bert_classifier_forward.13} parent=0 // pred_region
    _
  $region25: #{bert_classifier_forward.13} parent=0 // pred_fallthru
    _
  // Predicated region
  $region26: #{bert_classifier_forward.13} parent=0 // pred_check
    _
  $region27: #{bert_classifier_forward.13} parent=0 // pred_check_branch
    %120 = sbr.rel (0) target = $region29
  $region28: #{bert_classifier_forward.13} parent=0 // pred_region
    _
  $region29: #{bert_classifier_forward.13} parent=0 // pred_fallthru
    _

// kernel: bert_classifier_forward.14
$region0: #{bert_classifier_forward.14}
  #allocation0 [shape = 'u32[]', space=smem, size = 0x4, offset = 0x4, fixed_abs, tag = 'smem constant byte address 0x4 - core index']
  #allocation1 [shape = 'u32[72,128]{1,0:T(1,128)}', space=vmem, size = 0x9000, scoped, tag = 'internal scratch']
  %s0 = inlined_call_operand.vmem [shape: bf16[32,96], index: 0, kind: input, shape index: {}]
  %s1 = inlined_call_operand.vmem [shape: f32[2,1,16], index: 1, kind: input, shape index: {}]
  %s2 = inlined_call_operand.vmem [shape: bf16[32,32], index: 2, kind: output, shape index: {}]
  %s3 = sld [smem:[#allocation0]]
  $region41: #{bert_classifier_forward.14} parent=0
    _
  %s5 = ssub.s32 1, %s3
  %s6 = scalar_select 0, %s5, %s3
  loop: start=0, step=1, limit=4
  $region2: #{bert_classifier_forward.14} parent=0 // loop_pre_header
    _
  $region3: #{bert_classifier_forward.14} parent=0 // loop_header
    %s8 = sphi 0, %s12
    %p9 = scmp.ge.s32.totalorder %s8, 4
    %s18 = sphi 0, %s20
    %s21 = sphi 0, %s18
    %s22 = sphi 0, %s21
    %s38 = sphi 0, %s22
    %s44 = sphi 0, %s46
    %s47 = sphi 0, %s44
    %s48 = sphi 0, %s47
    %s64 = sphi 0, %s48
    %s70 = sphi 0, %s72
    %s73 = sphi 0, %s70
    %s74 = sphi 0, %s73
    %s90 = sphi 0, %s74
  $region4: #{bert_classifier_forward.14} parent=0 // loop_header_branch
    %11 = sbr.rel (%p9) target = $region8
  $region5: #{bert_classifier_forward.14} parent=0 // loop_body
    %s13 = ssub.s32 %s8, 1
    %s14 = ssub.s32 %s8, 2
    %s15 = sadd.s32 %s8, 1
    %s16 = ssub.s32 %s8, %s15
    %p17 = scmp.eq.s32.totalorder %s16, 0
    %s19 = sadd.s32 %s18, 1
    %s20 = scalar_select %p17, %s18, %s19
    %p23 = pneg %p17
    %p24 = scmp.eq.s32.totalorder %s8, 1
    %p25 = por %p23, %p24
    %p26 = scmp.ne.s32.totalorder %s18, %s21
    %p27 = scmp.eq.s32.totalorder %s8, 0
    %p28 = por %p26, %p27
    %p29 = scmp.ne.s32.totalorder %s18, %s21
    %p30 = scmp.eq.s32.totalorder %s13, 1
    %p31 = por %p29, %p30
    %p32 = scmp.ne.s32.totalorder %s21, %s22
    %p33 = scmp.eq.s32.totalorder %s13, 0
    %p34 = por %p32, %p33
    %p35 = scmp.ne.s32.totalorder %s21, %s22
    %p36 = scmp.eq.s32.totalorder %s14, 1
    %p37 = por %p35, %p36
    %p39 = scmp.ne.s32.totalorder %s22, %s38
    %p40 = scmp.eq.s32.totalorder %s14, 0
    %p41 = por %p39, %p40
    %s42 = ssub.s32 %s8, %s15
    %p43 = scmp.eq.s32.totalorder %s42, 0
    %s45 = sadd.s32 %s44, 1
    %s46 = scalar_select %p43, %s44, %s45
    %p49 = pneg %p43
    %p50 = scmp.eq.s32.totalorder %s8, 1
    %p51 = por %p49, %p50
    %p52 = scmp.ne.s32.totalorder %s44, %s47
    %p53 = scmp.eq.s32.totalorder %s8, 0
    %p54 = por %p52, %p53
    %p55 = scmp.ne.s32.totalorder %s44, %s47
    %p56 = scmp.eq.s32.totalorder %s13, 1
    %p57 = por %p55, %p56
    %p58 = scmp.ne.s32.totalorder %s47, %s48
    %p59 = scmp.eq.s32.totalorder %s13, 0
    %p60 = por %p58, %p59
    %p61 = scmp.ne.s32.totalorder %s47, %s48
    %p62 = scmp.eq.s32.totalorder %s14, 1
    %p63 = por %p61, %p62
    %p65 = scmp.ne.s32.totalorder %s48, %s64
    %p66 = scmp.eq.s32.totalorder %s14, 0
    %p67 = por %p65, %p66
    %s68 = ssub.s32 %s8, %s15
    %p69 = scmp.eq.s32.totalorder %s68, 0
    %s71 = sadd.s32 %s70, 1
    %s72 = scalar_select %p69, %s70, %s71
    %p75 = pneg %p69
    %p76 = scmp.eq.s32.totalorder %s8, 1
    %p77 = por %p75, %p76
    %p78 = scmp.ne.s32.totalorder %s70, %s73
    %p79 = scmp.eq.s32.totalorder %s8, 0
    %p80 = por %p78, %p79
    %p81 = scmp.ne.s32.totalorder %s70, %s73
    %p82 = scmp.eq.s32.totalorder %s13, 1
    %p83 = por %p81, %p82
    %p84 = scmp.ne.s32.totalorder %s73, %s74
    %p85 = scmp.eq.s32.totalorder %s13, 0
    %p86 = por %p84, %p85
    %p87 = scmp.ne.s32.totalorder %s73, %s74
    %p88 = scmp.eq.s32.totalorder %s14, 1
    %p89 = por %p87, %p88
    %p91 = scmp.ne.s32.totalorder %s74, %s90
    %p92 = scmp.eq.s32.totalorder %s14, 0
    %p93 = por %p91, %p92
    %p94 = scmp.le.s32.totalorder 1, %s8
    %p95 = scmp.lt.s32.totalorder %s8, 3
    %p96 = pnand %p94, %p95
    %p97 = pneg %p96
    // Predicated region
    $region9: #{bert_classifier_forward.14} parent=5 // pred_check
      _
    $region10: #{bert_classifier_forward.14} parent=5 // pred_check_branch
      %99 = sbr.rel (%p96) target = $region12
    $region11: #{bert_classifier_forward.14} parent=5 // pred_region
      %s100 = ssub.s32 %s8, 1
    $region12: #{bert_classifier_forward.14} parent=5 // pred_fallthru
      _
    %p101 = scmp.lt.s32.totalorder %s8, 2
    // Predicated region
    $region13: #{bert_classifier_forward.14} parent=5 // pred_check
      %p102 = pneg %p101
    $region14: #{bert_classifier_forward.14} parent=5 // pred_check_branch
      %104 = sbr.rel (%p102) target = $region16
    $region15: #{bert_classifier_forward.14} parent=5 // pred_region
      // Predicated region
      $region17: #{bert_classifier_forward.14} parent=15 // pred_check
        %p105 = pneg %p28
      $region18: #{bert_classifier_forward.14} parent=15 // pred_check_branch
        %107 = sbr.rel (%p105) target = $region20
      $region19: #{bert_classifier_forward.14} parent=15 // pred_region
        %s108 = smul.u32 2, %s8
        %p109 = scmp.lt.s32.totalorder %s108, 3
        %s110 = scalar_select %p109, %s108, 3
        %s111 = smul.addr %s110, 4
        %s112 = scalar_lea.vmem %s0, %s111
        %s113 = smul.u32 2, %s8
      $region20: #{bert_classifier_forward.14} parent=15 // pred_fallthru
        _
      // Predicated region
      $region21: #{bert_classifier_forward.14} parent=15 // pred_check
        %p114 = pneg %p54
      $region22: #{bert_classifier_forward.14} parent=15 // pred_check_branch
        %116 = sbr.rel (%p114) target = $region24
      $region23: #{bert_classifier_forward.14} parent=15 // pred_region
        %p117 = scmp.lt.s32.totalorder %s8, 1
        %s118 = scalar_select %p117, %s8, 1
        %s119 = scalar_lea.vmem %s1, %s118
      $region24: #{bert_classifier_forward.14} parent=15 // pred_fallthru
        _
    $region16: #{bert_classifier_forward.14} parent=5 // pred_fallthru
      _
    %p120 = scmp.le.s32.totalorder 1, %s8
    %p121 = scmp.lt.s32.totalorder %s8, 3
    %p122 = pnand %p120, %p121
    %p123 = pneg %p122
    // Predicated region
    $region25: #{bert_classifier_forward.14} parent=5 // pred_check
      _
    $region26: #{bert_classifier_forward.14} parent=5 // pred_check_branch
      %125 = sbr.rel (%p122) target = $region28
    $region27: #{bert_classifier_forward.14} parent=5 // pred_region
      %s126 = ssub.s32 %s8, 1
      %s127 = smul.u32 2, %s13
      %p128 = scmp.lt.s32.totalorder %s127, 3
      %s129 = scalar_select %p128, %s127, 3
      %s130 = smul.addr %s129, 4
      %s131 = scalar_lea.vmem %s0, %s130
      %p132 = pneg %p34
      %p133 = pneg %p31
      %p134 = scmp.lt.s32.totalorder %s13, 1
      %s135 = scalar_select %p134, %s13, 1
      %s136 = scalar_lea.vmem %s1, %s135
      %p137 = pneg %p60
      %p138 = pneg %p57
      %p139 = pneg %p86
      %p140 = pneg %p83
      %s141 = smul.u32 2, %s13
      %p142 = scmp.lt.s32.totalorder %s141, 3
      %s143 = scalar_select %p142, %s141, 3
      %s144 = smul.addr %s143, 4
      %s145 = scalar_lea.vmem %s2, %s144
      %s146 = smul.u32 2, %s13
      %p147 = scmp.lt.s32.totalorder %s146, 3
      %s148 = scalar_select %p147, %s146, 3
      %s149 = smul.addr %s148, 4
      %s150 = scalar_lea.vmem %s0, %s149
      %s151 = smul.u32 2, %s13
      %p152 = scmp.lt.s32.totalorder %s13, 1
      %s153 = scalar_select %p152, %s13, 1
      %s154 = scalar_lea.vmem %s1, %s153
      %s155 = smul.u32 2, %s13
      %p156 = scmp.lt.s32.totalorder %s155, 3
      %s157 = scalar_select %p156, %s155, 3
      %s158 = smul.addr %s157, 4
      %s159 = scalar_lea.vmem %s2, %s158
      %s160 = smul.u32 2, %s13
      %v162 = vld [vmem:[%s150] sm:$0xf]
      %v163 = vld [vmem:[%s150 + $0x4] sm:$0xf]
      %v164 = vld [vmem:[%s154] sm:$0x1]
      %v167 = vunpack.c.l.b16 %v162
      %v168 = vunpack.c.l.b16 %v163
      %v169 = vpack.c.b16 %v168, %v167
      %170 = vrot.lane.b32.xlu0 %v169, 96
      %v171 = vpop.permute.xlu0 %170
      %vm172 = vcmask 130048
      %v174 = vsel %vm172, %v169, 0
      %v177 = vsel %vm172, %v171, 0
      %179 = vmatpush.bf16.xpose.msra.mxu0 0
      %180 = vmatpush.bf16.xpose.msra.mxu0 0
      %181 = vmatpush.bf16.xpose.msra.mxu0 0
      %182 = vmatpush.bf16.xpose.msra.mxu0 0
      %183 = vmatpush.bf16.xpose.msra.mxu0 0
      %184 = vmatpush.bf16.xpose.msra.mxu0 0
      %185 = vmatpush.bf16.xpose.msra.mxu0 0
      %186 = vmatpush.bf16.xpose.msra.mxu0 %v177
      %187 = vmatmul.bf16.gmra.mxu0 %v174
      %v188 = vpop.f32.mrf.mxu0
      %v189 = vadd.f32 0.0, %v188
      %v190 = vpop.f32.mrf.mxu0
      %v191 = vadd.f32 0.0, %v190
      %192 = vdwg.mxu0
      %v193 = vmul.f32 %v189, 0.25
      %v194 = vmul.f32 %v191, 0.25
      %v196 = vperm.slane %v164, 0
      %v198 = vadd.f32 %v193, %v196
      %v199 = vadd.f32 %v194, %v196
      %v200 = vsel %vm172, %v198, -inf
      %201 = vmax.xlane.f32.xlu0 %v200
      %v202 = vpop.xlane.xlu0 %201
      %v203 = vsel %vm172, %v199, -inf
      %204 = vmax.xlane.f32.xlu0 %v203
      %v205 = vpop.xlane.xlu0 %204
      %v206 = vsub.f32 %v198, %v202
      %v207 = vsub.f32 %v199, %v205
      %v208 = vmul.f32 %v206, 1.442695
      %v209 = vpow.pop %v208
      %v210 = vmul.f32 %v207, 1.442695
      %v211 = vpow.pop %v210
      %v212 = vsel %vm172, %v209, 0.0
      %213 = vadd.xlane.f32.xlu0 %v212
      %v214 = vpop.xlane.xlu0 %213
      %v215 = vsel %vm172, %v211, 0.0
      %216 = vadd.xlane.f32.xlu0 %v215
      %v217 = vpop.xlane.xlu0 %216
      %v218 = vrcp.pop %v214
      %v219 = vrcp.pop %v217
      %v220 = vmul.f32 %v209, %v218
      %v221 = vmul.f32 %v211, %v219
      %v222 = vpack.c.bf16 %v221, %v220
      %223 = vrot.lane.b32.xlu0 %v169, 64
      %v224 = vpop.permute.xlu0 %223
      %v227 = vsel %vm172, %v222, 0
      %229 = vmatpush.bf16.msra.mxu0 0
      %230 = vmatpush.bf16.msra.mxu0 0
      %231 = vmatpush.bf16.msra.mxu0 0
      %232 = vmatpush.bf16.msra.mxu0 0
      %233 = vmatpush.bf16.msra.mxu0 0
      %234 = vmatpush.bf16.msra.mxu0 0
      %235 = vmatpush.bf16.msra.mxu0 0
      %236 = vmatpush.bf16.msra.mxu0 %v224
      %237 = vmatmul.bf16.gmra.mxu0 %v227
      %v238 = vpop.f32.mrf.mxu0
      %v239 = vadd.f32 0.0, %v238
      %v240 = vpop.f32.mrf.mxu0
      %v241 = vadd.f32 0.0, %v240
      %242 = vdwg.mxu0
      %243 = vrot.lane.b32.xlu0 %v169, 112
      %v244 = vpop.permute.xlu0 %243
      %245 = vrot.lane.b32.xlu0 %v169, 80
      %v246 = vpop.permute.xlu0 %245
      %v248 = vsel %vm172, %v244, 0
      %v251 = vsel %vm172, %v246, 0
      %253 = vmatpush.bf16.xpose.msra.mxu0 0
      %254 = vmatpush.bf16.xpose.msra.mxu0 0
      %255 = vmatpush.bf16.xpose.msra.mxu0 0
      %256 = vmatpush.bf16.xpose.msra.mxu0 0
      %257 = vmatpush.bf16.xpose.msra.mxu0 0
      %258 = vmatpush.bf16.xpose.msra.mxu0 0
      %259 = vmatpush.bf16.xpose.msra.mxu0 0
      %260 = vmatpush.bf16.xpose.msra.mxu0 %v251
      %261 = vmatmul.bf16.gmra.mxu0 %v248
      %v262 = vpop.f32.mrf.mxu0
      %v263 = vadd.f32 0.0, %v262
      %v264 = vpop.f32.mrf.mxu0
      %v265 = vadd.f32 0.0, %v264
      %266 = vdwg.mxu0
      %v267 = vmul.f32 %v263, 0.25
      %v268 = vmul.f32 %v265, 0.25
      %v269 = vadd.f32 %v267, %v196
      %v270 = vadd.f32 %v268, %v196
      %v271 = vsel %vm172, %v269, -inf
      %272 = vmax.xlane.f32.xlu0 %v271
      %v273 = vpop.xlane.xlu0 %272
      %v274 = vsel %vm172, %v270, -inf
      %275 = vmax.xlane.f32.xlu0 %v274
      %v276 = vpop.xlane.xlu0 %275
      %v277 = vsub.f32 %v269, %v273
      %v278 = vsub.f32 %v270, %v276
      %v279 = vmul.f32 %v277, 1.442695
      %v280 = vpow.pop %v279
      %v281 = vmul.f32 %v278, 1.442695
      %v282 = vpow.pop %v281
      %v283 = vsel %vm172, %v280, 0.0
      %284 = vadd.xlane.f32.xlu0 %v283
      %v285 = vpop.xlane.xlu0 %284
      %v286 = vsel %vm172, %v282, 0.0
      %287 = vadd.xlane.f32.xlu0 %v286
      %v288 = vpop.xlane.xlu0 %287
      %v289 = vrcp.pop %v285
      %v290 = vrcp.pop %v288
      %v291 = vmul.f32 %v280, %v289
      %v292 = vmul.f32 %v282, %v290
      %v293 = vpack.c.bf16 %v292, %v291
      %294 = vrot.lane.b32.xlu0 %v169, 48
      %v295 = vpop.permute.xlu0 %294
      %v298 = vsel %vm172, %v293, 0
      %300 = vmatpush.bf16.msra.mxu0 0
      %301 = vmatpush.bf16.msra.mxu0 0
      %302 = vmatpush.bf16.msra.mxu0 0
      %303 = vmatpush.bf16.msra.mxu0 0
      %304 = vmatpush.bf16.msra.mxu0 0
      %305 = vmatpush.bf16.msra.mxu0 0
      %306 = vmatpush.bf16.msra.mxu0 0
      %307 = vmatpush.bf16.msra.mxu0 %v295
      %308 = vmatmul.bf16.gmra.mxu0 %v298
      %v309 = vpop.f32.mrf.mxu0
      %v310 = vadd.f32 0.0, %v309
      %v311 = vpop.f32.mrf.mxu0
      %v312 = vadd.f32 0.0, %v311
      %313 = vdwg.mxu0
      %316 = vrot.lane.b32.xlu0 %v310, 16
      %v317 = vpop.permute.xlu0 %316
      %318 = vrot.lane.b32.xlu0 %v312, 16
      %v319 = vpop.permute.xlu0 %318
      %v322 = vsel %vm172, %v239, %v317
      %v323 = vsel %vm172, %v241, %v319
      %v324 = vpack.c.bf16 %v322, %v322
      %v325 = vpack.c.bf16 %v323, %v323
      %vm326 = vcmask 257024
      %327 = vst.msk [vmem:[%s159] sm:$0xf] %vm326, %v324
      %328 = vst.msk [vmem:[%s159 + $0x4] sm:$0xf] %vm326, %v325
      %s329 = smul.u32 2, %s13
      %p330 = scmp.lt.s32.totalorder %s329, 3
      %s331 = scalar_select %p330, %s329, 3
      %s332 = smul.addr %s331, 4
      %s333 = scalar_lea.vmem %s2, %s332
      // Predicated region
      $region29: #{bert_classifier_forward.14} parent=27 // pred_check
        %p334 = pneg %p83
      $region30: #{bert_classifier_forward.14} parent=27 // pred_check_branch
        %336 = sbr.rel (%p334) target = $region32
      $region31: #{bert_classifier_forward.14} parent=27 // pred_region
        %s337 = smul.u32 2, %s13
      $region32: #{bert_classifier_forward.14} parent=27 // pred_fallthru
        _
    $region28: #{bert_classifier_forward.14} parent=5 // pred_fallthru
      _
    %p338 = scmp.le.s32.totalorder 2, %s8
    // Predicated region
    $region33: #{bert_classifier_forward.14} parent=5 // pred_check
      %p339 = pneg %p338
    $region34: #{bert_classifier_forward.14} parent=5 // pred_check_branch
      %341 = sbr.rel (%p339) target = $region36
    $region35: #{bert_classifier_forward.14} parent=5 // pred_region
      %s342 = ssub.s32 %s8, 2
      // Predicated region
      $region37: #{bert_classifier_forward.14} parent=35 // pred_check
        %p343 = pneg %p89
      $region38: #{bert_classifier_forward.14} parent=35 // pred_check_branch
        %345 = sbr.rel (%p343) target = $region40
      $region39: #{bert_classifier_forward.14} parent=35 // pred_region
        %s346 = smul.u32 2, %s14
        %p347 = scmp.lt.s32.totalorder %s346, 3
        %s348 = scalar_select %p347, %s346, 3
        %s349 = smul.addr %s348, 4
        %s350 = scalar_lea.vmem %s2, %s349
      $region40: #{bert_classifier_forward.14} parent=35 // pred_fallthru
        _
    $region36: #{bert_classifier_forward.14} parent=5 // pred_fallthru
      _
  $region6: #{bert_classifier_forward.14} parent=0 // loop_footer
    %s12 = sadd.s32 1, %s8
  $region7: #{bert_classifier_forward.14} parent=0 // loop_footer_branch
    %7 = sbr.rel target = $region3
  $region8: #{bert_classifier_forward.14} parent=0 // loop_exit
    _

// kernel: bert_classifier_forward.15
$region0: #{bert_classifier_forward.15}
  #allocation0 [shape = 'u32[]', space=smem, size = 0x4, offset = 0x4, fixed_abs, tag = 'smem constant byte address 0x4 - core index']
  #allocation1 [shape = 'u32[72,128]{1,0:T(1,128)}', space=vmem, size = 0x9000, scoped, tag = 'internal scratch']
  #allocation2 [shape = 'f32[32,32]{1,0:T(8,128)}', space=vmem, size = 0x4000, scoped, tag = 'scratch operand']
  %s0 = inlined_call_operand.vmem [shape: bf16[32,32], index: 0, kind: input, shape index: {}]
  %s1 = inlined_call_operand.vmem [shape: bf16[32,32], index: 1, kind: input, shape index: {}]
  %s2 = inlined_call_operand.vmem [shape: f32[1,32], index: 2, kind: input, shape index: {}]
  %s3 = inlined_call_operand.vmem [shape: bf16[32,32], index: 3, kind: input, shape index: {}]
  %s4 = inlined_call_operand.vmem [shape: f32[1,32], index: 4, kind: input, shape index: {}]
  %s5 = inlined_call_operand.vmem [shape: f32[1,32], index: 5, kind: input, shape index: {}]
  %s6 = inlined_call_operand.vmem [shape: bf16[32,32], index: 6, kind: output, shape index: {}]
  %s7 = sld [smem:[#allocation0]]
  $region42: #{bert_classifier_forward.15} parent=0
    _
  %s9 = ssub.s32 1, %s7
  %s10 = scalar_select 0, %s9, %s7
  // Predicated region
  $region2: #{bert_classifier_forward.15} parent=0 // pred_check
    _
  $region3: #{bert_classifier_forward.15} parent=0 // pred_check_branch
    %12 = sbr.rel (0) target = $region5
  $region4: #{bert_classifier_forward.15} parent=0 // pred_region
    _
  $region5: #{bert_classifier_forward.15} parent=0 // pred_fallthru
    _
  // Predicated region
  $region6: #{bert_classifier_forward.15} parent=0 // pred_check
    _
  $region7: #{bert_classifier_forward.15} parent=0 // pred_check_branch
    %14 = sbr.rel (0) target = $region9
  $region8: #{bert_classifier_forward.15} parent=0 // pred_region
    _
  $region9: #{bert_classifier_forward.15} parent=0 // pred_fallthru
    _
  // Predicated region
  $region10: #{bert_classifier_forward.15} parent=0 // pred_check
    _
  $region11: #{bert_classifier_forward.15} parent=0 // pred_check_branch
    %16 = sbr.rel (0) target = $region13
  $region12: #{bert_classifier_forward.15} parent=0 // pred_region
    _
  $region13: #{bert_classifier_forward.15} parent=0 // pred_fallthru
    _
  // Predicated region
  $region14: #{bert_classifier_forward.15} parent=0 // pred_check
    _
  $region15: #{bert_classifier_forward.15} parent=0 // pred_check_branch
    %18 = sbr.rel (0) target = $region17
  $region16: #{bert_classifier_forward.15} parent=0 // pred_region
    _
  $region17: #{bert_classifier_forward.15} parent=0 // pred_fallthru
    _
  // Predicated region
  $region18: #{bert_classifier_forward.15} parent=0 // pred_check
    _
  $region19: #{bert_classifier_forward.15} parent=0 // pred_check_branch
    %20 = sbr.rel (0) target = $region21
  $region20: #{bert_classifier_forward.15} parent=0 // pred_region
    _
  $region21: #{bert_classifier_forward.15} parent=0 // pred_fallthru
    _
  // Predicated region
  $region22: #{bert_classifier_forward.15} parent=0 // pred_check
    _
  $region23: #{bert_classifier_forward.15} parent=0 // pred_check_branch
    %22 = sbr.rel (0) target = $region25
  $region24: #{bert_classifier_forward.15} parent=0 // pred_region
    _
  $region25: #{bert_classifier_forward.15} parent=0 // pred_fallthru
    _
  %p24 = scmp.eq.s32.totalorder 0, 0
  // Predicated region
  $region26: #{bert_classifier_forward.15} parent=0 // pred_check
    %p25 = pneg %p24
  $region27: #{bert_classifier_forward.15} parent=0 // pred_check_branch
    %27 = sbr.rel (%p25) target = $region29
  $region28: #{bert_classifier_forward.15} parent=0 // pred_region
    %vm28 = vcmask 261120
    %29 = vst.msk [vmem:[#allocation2] sm:$0xff] %vm28, 0.0
    %30 = vst.msk [vmem:[#allocation2 + $0x8] sm:$0xff] %vm28, 0.0
    %31 = vst.msk [vmem:[#allocation2 + $0x10] sm:$0xff] %vm28, 0.0
    %32 = vst.msk [vmem:[#allocation2 + $0x18] sm:$0xff] %vm28, 0.0
  $region29: #{bert_classifier_forward.15} parent=0 // pred_fallthru
    _
  %v33 = vld [vmem:[#allocation2] sm:$0xff]
  %v34 = vld [vmem:[#allocation2 + $0x8] sm:$0xff]
  %v35 = vld [vmem:[#allocation2 + $0x10] sm:$0xff]
  %v36 = vld [vmem:[#allocation2 + $0x18] sm:$0xff]
  %v37 = vld [vmem:[%s0] sm:$0xf]
  %v38 = vld [vmem:[%s0 + $0x4] sm:$0xf]
  %v39 = vld [vmem:[%s0 + $0x8] sm:$0xf]
  %v40 = vld [vmem:[%s0 + $0xc] sm:$0xf]
  %v41 = vld [vmem:[%s1] sm:$0xf]
  %v42 = vld [vmem:[%s1 + $0x4] sm:$0xf]
  %v43 = vld [vmem:[%s1 + $0x8] sm:$0xf]
  %v44 = vld [vmem:[%s1 + $0xc] sm:$0xf]
  %v49 = vunpack.c.l.b16 %v37
  %v50 = vunpack.c.l.b16 %v38
  %v51 = vunpack.c.l.b16 %v39
  %v52 = vunpack.c.l.b16 %v40
  %v53 = vpack.c.b16 %v50, %v49
  %v54 = vpack.c.b16 %v52, %v51
  %v59 = vunpack.c.l.b16 %v41
  %v60 = vunpack.c.l.b16 %v42
  %v61 = vunpack.c.l.b16 %v43
  %v62 = vunpack.c.l.b16 %v44
  %v63 = vpack.c.b16 %v60, %v59
  %v64 = vpack.c.b16 %v62, %v61
  %vm67 = vcmask 261120
  %v69 = vsel %vm67, %v53, 0
  %v72 = vsel %vm67, %v54, 0
  %74 = vmatpush.bf16.msra.mxu0 0
  %75 = vmatpush.bf16.msra.mxu0 0
  %76 = vmatpush.bf16.msra.mxu0 0
  %77 = vmatpush.bf16.msra.mxu0 0
  %78 = vmatpush.bf16.msra.mxu0 0
  %79 = vmatpush.bf16.msra.mxu0 0
  %80 = vmatpush.bf16.msra.mxu0 %v64
  %81 = vmatpush.bf16.msra.mxu0 %v63
  %82 = vmatmul.bf16.gmra.mxu0 %v69
  %v83 = vpop.f32.mrf.mxu0
  %v84 = vadd.f32 0.0, %v83
  %v85 = vpop.f32.mrf.mxu0
  %v86 = vadd.f32 0.0, %v85
  %87 = vmatmul.bf16.gmra.mxu0 %v72
  %v88 = vpop.f32.mrf.mxu0
  %v89 = vadd.f32 0.0, %v88
  %v90 = vpop.f32.mrf.mxu0
  %v91 = vadd.f32 0.0, %v90
  %92 = vdwg.mxu0
  %v93 = vadd.f32 %v33, %v84
  %v94 = vadd.f32 %v34, %v86
  %v95 = vadd.f32 %v35, %v89
  %v96 = vadd.f32 %v36, %v91
  %97 = vst.msk [vmem:[#allocation2] sm:$0xff] %vm67, %v93
  %98 = vst.msk [vmem:[#allocation2 + $0x8] sm:$0xff] %vm67, %v94
  %99 = vst.msk [vmem:[#allocation2 + $0x10] sm:$0xff] %vm67, %v95
  %100 = vst.msk [vmem:[#allocation2 + $0x18] sm:$0xff] %vm67, %v96
  // Predicated region
  $region30: #{bert_classifier_forward.15} parent=0 // pred_check
    %p101 = pneg %p24
  $region31: #{bert_classifier_forward.15} parent=0 // pred_check_branch
    %103 = sbr.rel (%p101) target = $region33
  $region32: #{bert_classifier_forward.15} parent=0 // pred_region
    %v104 = vld [vmem:[#allocation2] sm:$0xff]
    %v105 = vld [vmem:[#allocation2 + $0x8] sm:$0xff]
    %v106 = vld [vmem:[#allocation2 + $0x10] sm:$0xff]
    %v107 = vld [vmem:[#allocation2 + $0x18] sm:$0xff]
    %v108 = vld [vmem:[%s2] sm:$0x1]
    %v110 = vperm.slane %v108, 0
    %v112 = vadd.f32 %v104, %v110
    %v113 = vadd.f32 %v105, %v110
    %v114 = vadd.f32 %v106, %v110
    %v115 = vadd.f32 %v107, %v110
    %v116 = vld [vmem:[%s3] sm:$0xf]
    %v117 = vld [vmem:[%s3 + $0x4] sm:$0xf]
    %v118 = vld [vmem:[%s3 + $0x8] sm:$0xf]
    %v119 = vld [vmem:[%s3 + $0xc] sm:$0xf]
    %v120 = vunpack.c.l.bf16 %v116
    %v121 = vunpack.c.l.bf16 %v117
    %v122 = vunpack.c.l.bf16 %v118
    %v123 = vunpack.c.l.bf16 %v119
    %v124 = vadd.f32 %v112, %v120
    %v125 = vadd.f32 %v113, %v121
    %v126 = vadd.f32 %v114, %v122
    %v127 = vadd.f32 %v115, %v123
    %v128 = vsel %vm67, %v124, 0.0
    %129 = vadd.xlane.f32.xlu0 %v128
    %v130 = vpop.xlane.xlu0 %129
    %v131 = vsel %vm67, %v125, 0.0
    %132 = vadd.xlane.f32.xlu0 %v131
    %v133 = vpop.xlane.xlu0 %132
    %v134 = vsel %vm67, %v126, 0.0
    %135 = vadd.xlane.f32.xlu0 %v134
    %v136 = vpop.xlane.xlu0 %135
    %v137 = vsel %vm67, %v127, 0.0
    %138 = vadd.xlane.f32.xlu0 %v137
    %v139 = vpop.xlane.xlu0 %138
    %v140 = vrcp.pop 32.0
    %v141 = vmul.f32 32.0, %v140
    %v142 = vsub.f32 1.0, %v141
    %v143 = vmul.f32 %v140, %v142
    %v144 = vadd.f32 %v140, %v143
    %vm145 = vweird.f32 %v140
    %v146 = vsel %vm145, %v140, %v144
    %v147 = vmul.f32 %v130, %v146
    %v148 = vmul.f32 %v133, %v146
    %v149 = vmul.f32 %v136, %v146
    %v150 = vmul.f32 %v139, %v146
    %v151 = vsub.f32 %v124, %v147
    %v152 = vsub.f32 %v125, %v148
    %v153 = vsub.f32 %v126, %v149
    %v154 = vsub.f32 %v127, %v150
    %v155 = vmul.f32 %v151, %v151
    %v156 = vmul.f32 %v152, %v152
    %v157 = vmul.f32 %v153, %v153
    %v158 = vmul.f32 %v154, %v154
    %v159 = vsel %vm67, %v155, 0.0
    %160 = vadd.xlane.f32.xlu0 %v159
    %v161 = vpop.xlane.xlu0 %160
    %v162 = vsel %vm67, %v156, 0.0
    %163 = vadd.xlane.f32.xlu0 %v162
    %v164 = vpop.xlane.xlu0 %163
    %v165 = vsel %vm67, %v157, 0.0
    %166 = vadd.xlane.f32.xlu0 %v165
    %v167 = vpop.xlane.xlu0 %166
    %v168 = vsel %vm67, %v158, 0.0
    %169 = vadd.xlane.f32.xlu0 %v168
    %v170 = vpop.xlane.xlu0 %169
    %v171 = vmul.f32 %v161, %v146
    %v172 = vmul.f32 %v164, %v146
    %v173 = vmul.f32 %v167, %v146
    %v174 = vmul.f32 %v170, %v146
    %v175 = vadd.f32 %v171, 1e-12
    %v176 = vadd.f32 %v172, 1e-12
    %v177 = vadd.f32 %v173, 1e-12
    %v178 = vadd.f32 %v174, 1e-12
    %v179 = vrsqrt.pop %v175
    %v180 = vmul.f32 %v179, %v175
    %v181 = vmul.f32 %v180, %v179
    %v182 = vmul.f32 0.5, %v181
    %v183 = vsub.f32 1.5, %v182
    %v184 = vmul.f32 %v179, %v183
    %vm185 = vweird.f32 %v175
    %vm186 = vweird.f32 %v179
    %vm187 = vmor %vm185, %vm186
    %v188 = vsel %vm187, %v179, %v184
    %v189 = vrsqrt.pop %v176
    %v190 = vmul.f32 %v189, %v176
    %v191 = vmul.f32 %v190, %v189
    %v192 = vmul.f32 0.5, %v191
    %v193 = vsub.f32 1.5, %v192
    %v194 = vmul.f32 %v189, %v193
    %vm195 = vweird.f32 %v176
    %vm196 = vweird.f32 %v189
    %vm197 = vmor %vm195, %vm196
    %v198 = vsel %vm197, %v189, %v194
    %v199 = vrsqrt.pop %v177
    %v200 = vmul.f32 %v199, %v177
    %v201 = vmul.f32 %v200, %v199
    %v202 = vmul.f32 0.5, %v201
    %v203 = vsub.f32 1.5, %v202
    %v204 = vmul.f32 %v199, %v203
    %vm205 = vweird.f32 %v177
    %vm206 = vweird.f32 %v199
    %vm207 = vmor %vm205, %vm206
    %v208 = vsel %vm207, %v199, %v204
    %v209 = vrsqrt.pop %v178
    %v210 = vmul.f32 %v209, %v178
    %v211 = vmul.f32 %v210, %v209
    %v212 = vmul.f32 0.5, %v211
    %v213 = vsub.f32 1.5, %v212
    %v214 = vmul.f32 %v209, %v213
    %vm215 = vweird.f32 %v178
    %vm216 = vweird.f32 %v209
    %vm217 = vmor %vm215, %vm216
    %v218 = vsel %vm217, %v209, %v214
    %v219 = vmul.f32 %v151, %v188
    %v220 = vmul.f32 %v152, %v198
    %v221 = vmul.f32 %v153, %v208
    %v222 = vmul.f32 %v154, %v218
    %v223 = vld [vmem:[%s4] sm:$0x1]
    %v225 = vperm.slane %v223, 0
    %v227 = vmul.f32 %v219, %v225
    %v228 = vmul.f32 %v220, %v225
    %v229 = vmul.f32 %v221, %v225
    %v230 = vmul.f32 %v222, %v225
    %v231 = vld [vmem:[%s5] sm:$0x1]
    %v233 = vperm.slane %v231, 0
    %v235 = vadd.f32 %v227, %v233
    %v236 = vadd.f32 %v228, %v233
    %v237 = vadd.f32 %v229, %v233
    %v238 = vadd.f32 %v230, %v233
    %v239 = vpack.c.bf16 %v235, %v235
    %v240 = vpack.c.bf16 %v236, %v236
    %v241 = vpack.c.bf16 %v237, %v237
    %v242 = vpack.c.bf16 %v238, %v238
    %vm243 = vcmask 257024
    %244 = vst.msk [vmem:[%s6] sm:$0xf] %vm243, %v239
    %245 = vst.msk [vmem:[%s6 + $0x4] sm:$0xf] %vm243, %v240
    %246 = vst.msk [vmem:[%s6 + $0x8] sm:$0xf] %vm243, %v241
    %247 = vst.msk [vmem:[%s6 + $0xc] sm:$0xf] %vm243, %v242
  $region33: #{bert_classifier_forward.15} parent=0 // pred_fallthru
    _
  // Predicated region
  $region34: #{bert_classifier_forward.15} parent=0 // pred_check
    _
  $region35: #{bert_classifier_forward.15} parent=0 // pred_check_branch
    %249 = sbr.rel (0) target = $region37
  $region36: #{bert_classifier_forward.15} parent=0 // pred_region
    _
  $region37: #{bert_classifier_forward.15} parent=0 // pred_fallthru
    _
  // Predicated region
  $region38: #{bert_classifier_forward.15} parent=0 // pred_check
    _
  $region39: #{bert_classifier_forward.15} parent=0 // pred_check_branch
    %251 = sbr.rel (0) target = $region41
  $region40: #{bert_classifier_forward.15} parent=0 // pred_region
    _
  $region41: #{bert_classifier_forward.15} parent=0 // pred_fallthru
    _

// kernel: bert_classifier_forward.16
$region0: #{bert_classifier_forward.16}
  #allocation0 [shape = 'u32[]', space=smem, size = 0x4, offset = 0x4, fixed_abs, tag = 'smem constant byte address 0x4 - core index']
  #allocation1 [shape = 'u32[72,128]{1,0:T(1,128)}', space=vmem, size = 0x9000, scoped, tag = 'internal scratch']
  #allocation2 [shape = 'f32[32,64]{1,0:T(8,128)}', space=vmem, size = 0x4000, scoped, tag = 'scratch operand']
  %s0 = inlined_call_operand.vmem [shape: bf16[32,32], index: 0, kind: input, shape index: {}]
  %s1 = inlined_call_operand.vmem [shape: bf16[32,64], index: 1, kind: input, shape index: {}]
  %s2 = inlined_call_operand.vmem [shape: f32[1,64], index: 2, kind: input, shape index: {}]
  %s3 = inlined_call_operand.vmem [shape: bf16[32,64], index: 3, kind: output, shape index: {}]
  %s4 = sld [smem:[#allocation0]]
  $region30: #{bert_classifier_forward.16} parent=0
    _
  %s6 = ssub.s32 1, %s4
  %s7 = scalar_select 0, %s6, %s4
  // Predicated region
  $region2: #{bert_classifier_forward.16} parent=0 // pred_check
    _
  $region3: #{bert_classifier_forward.16} parent=0 // pred_check_branch
    %9 = sbr.rel (0) target = $region5
  $region4: #{bert_classifier_forward.16} parent=0 // pred_region
    _
  $region5: #{bert_classifier_forward.16} parent=0 // pred_fallthru
    _
  // Predicated region
  $region6: #{bert_classifier_forward.16} parent=0 // pred_check
    _
  $region7: #{bert_classifier_forward.16} parent=0 // pred_check_branch
    %11 = sbr.rel (0) target = $region9
  $region8: #{bert_classifier_forward.16} parent=0 // pred_region
    _
  $region9: #{bert_classifier_forward.16} parent=0 // pred_fallthru
    _
  // Predicated region
  $region10: #{bert_classifier_forward.16} parent=0 // pred_check
    _
  $region11: #{bert_classifier_forward.16} parent=0 // pred_check_branch
    %13 = sbr.rel (0) target = $region13
  $region12: #{bert_classifier_forward.16} parent=0 // pred_region
    _
  $region13: #{bert_classifier_forward.16} parent=0 // pred_fallthru
    _
  %p15 = scmp.eq.s32.totalorder 0, 0
  // Predicated region
  $region14: #{bert_classifier_forward.16} parent=0 // pred_check
    %p16 = pneg %p15
  $region15: #{bert_classifier_forward.16} parent=0 // pred_check_branch
    %18 = sbr.rel (%p16) target = $region17
  $region16: #{bert_classifier_forward.16} parent=0 // pred_region
    %vm19 = vcmask 523264
    %20 = vst.msk [vmem:[#allocation2] sm:$0xff] %vm19, 0.0
    %21 = vst.msk [vmem:[#allocation2 + $0x8] sm:$0xff] %vm19, 0.0
    %22 = vst.msk [vmem:[#allocation2 + $0x10] sm:$0xff] %vm19, 0.0
    %23 = vst.msk [vmem:[#allocation2 + $0x18] sm:$0xff] %vm19, 0.0
  $region17: #{bert_classifier_forward.16} parent=0 // pred_fallthru
    _
  %v24 = vld [vmem:[#allocation2] sm:$0xff]
  %v25 = vld [vmem:[#allocation2 + $0x8] sm:$0xff]
  %v26 = vld [vmem:[#allocation2 + $0x10] sm:$0xff]
  %v27 = vld [vmem:[#allocation2 + $0x18] sm:$0xff]
  %v28 = vld [vmem:[%s0] sm:$0xf]
  %v29 = vld [vmem:[%s0 + $0x4] sm:$0xf]
  %v30 = vld [vmem:[%s0 + $0x8] sm:$0xf]
  %v31 = vld [vmem:[%s0 + $0xc] sm:$0xf]
  %v32 = vld [vmem:[%s1] sm:$0xf]
  %v33 = vld [vmem:[%s1 + $0x4] sm:$0xf]
  %v34 = vld [vmem:[%s1 + $0x8] sm:$0xf]
  %v35 = vld [vmem:[%s1 + $0xc] sm:$0xf]
  %v40 = vunpack.c.l.b16 %v28
  %v41 = vunpack.c.l.b16 %v29
  %v42 = vunpack.c.l.b16 %v30
  %v43 = vunpack.c.l.b16 %v31
  %v44 = vpack.c.b16 %v41, %v40
  %v45 = vpack.c.b16 %v43, %v42
  %v50 = vunpack.c.l.b16 %v32
  %v51 = vunpack.c.l.b16 %v33
  %v52 = vunpack.c.l.b16 %v34
  %v53 = vunpack.c.l.b16 %v35
  %v54 = vpack.c.b16 %v51, %v50
  %v55 = vpack.c.b16 %v53, %v52
  %vm58 = vcmask 261120
  %v60 = vsel %vm58, %v44, 0
  %v63 = vsel %vm58, %v45, 0
  %65 = vmatpush.bf16.msra.mxu0 0
  %66 = vmatpush.bf16.msra.mxu0 0
  %67 = vmatpush.bf16.msra.mxu0 0
  %68 = vmatpush.bf16.msra.mxu0 0
  %69 = vmatpush.bf16.msra.mxu0 0
  %70 = vmatpush.bf16.msra.mxu0 0
  %71 = vmatpush.bf16.msra.mxu0 %v55
  %72 = vmatpush.bf16.msra.mxu0 %v54
  %73 = vmatmul.bf16.gmra.mxu0 %v60
  %v74 = vpop.f32.mrf.mxu0
  %v75 = vadd.f32 0.0, %v74
  %v76 = vpop.f32.mrf.mxu0
  %v77 = vadd.f32 0.0, %v76
  %78 = vmatmul.bf16.gmra.mxu0 %v63
  %v79 = vpop.f32.mrf.mxu0
  %v80 = vadd.f32 0.0, %v79
  %v81 = vpop.f32.mrf.mxu0
  %v82 = vadd.f32 0.0, %v81
  %83 = vdwg.mxu0
  %v84 = vadd.f32 %v24, %v75
  %v85 = vadd.f32 %v25, %v77
  %v86 = vadd.f32 %v26, %v80
  %v87 = vadd.f32 %v27, %v82
  %vm88 = vcmask 523264
  %89 = vst.msk [vmem:[#allocation2] sm:$0xff] %vm88, %v84
  %90 = vst.msk [vmem:[#allocation2 + $0x8] sm:$0xff] %vm88, %v85
  %91 = vst.msk [vmem:[#allocation2 + $0x10] sm:$0xff] %vm88, %v86
  %92 = vst.msk [vmem:[#allocation2 + $0x18] sm:$0xff] %vm88, %v87
  // Predicated region
  $region18: #{bert_classifier_forward.16} parent=0 // pred_check
    %p93 = pneg %p15
  $region19: #{bert_classifier_forward.16} parent=0 // pred_check_branch
    %95 = sbr.rel (%p93) target = $region21
  $region20: #{bert_classifier_forward.16} parent=0 // pred_region
    %v96 = vld [vmem:[#allocation2] sm:$0xff]
    %v97 = vld [vmem:[#allocation2 + $0x8] sm:$0xff]
    %v98 = vld [vmem:[#allocation2 + $0x10] sm:$0xff]
    %v99 = vld [vmem:[#allocation2 + $0x18] sm:$0xff]
    %v100 = vld [vmem:[%s2] sm:$0x1]
    %v102 = vperm.slane %v100, 0
    %v104 = vadd.f32 %v96, %v102
    %v105 = vadd.f32 %v97, %v102
    %v106 = vadd.f32 %v98, %v102
    %v107 = vadd.f32 %v99, %v102
    %v108 = vmul.f32 %v104, 0.5
    %v109 = vmul.f32 %v105, 0.5
    %v110 = vmul.f32 %v106, 0.5
    %v111 = vmul.f32 %v107, 0.5
    %v112 = vmul.f32 %v104, 0.044715
    %v113 = vmul.f32 %v105, 0.044715
    %v114 = vmul.f32 %v106, 0.044715
    %v115 = vmul.f32 %v107, 0.044715
    %v116 = vmul.f32 %v112, %v104
    %v117 = vmul.f32 %v113, %v105
    %v118 = vmul.f32 %v114, %v106
    %v119 = vmul.f32 %v115, %v107
    %v120 = vmul.f32 %v116, %v104
    %v121 = vmul.f32 %v117, %v105
    %v122 = vmul.f32 %v118, %v106
    %v123 = vmul.f32 %v119, %v107
    %v124 = vadd.f32 %v104, %v120
    %v125 = vadd.f32 %v105, %v121
    %v126 = vadd.f32 %v106, %v122
    %v127 = vadd.f32 %v107, %v123
    %v128 = vmul.f32 %v124, 0.7978846
    %v129 = vmul.f32 %v125, 0.7978846
    %v130 = vmul.f32 %v126, 0.7978846
    %v131 = vmul.f32 %v127, 0.7978846
    %v132 = vtanh.pop %v128
    %v133 = vtanh.pop %v129
    %v134 = vtanh.pop %v130
    %v135 = vtanh.pop %v131
    %v136 = vadd.f32 %v132, 1.0
    %v137 = vadd.f32 %v133, 1.0
    %v138 = vadd.f32 %v134, 1.0
    %v139 = vadd.f32 %v135, 1.0
    %v140 = vmul.f32 %v108, %v136
    %v141 = vmul.f32 %v109, %v137
    %v142 = vmul.f32 %v110, %v138
    %v143 = vmul.f32 %v111, %v139
    %v144 = vpack.c.bf16 %v140, %v140
    %v145 = vpack.c.bf16 %v141, %v141
    %v146 = vpack.c.bf16 %v142, %v142
    %v147 = vpack.c.bf16 %v143, %v143
    %vm148 = vcmask 519168
    %149 = vst.msk [vmem:[%s3] sm:$0xf] %vm148, %v144
    %150 = vst.msk [vmem:[%s3 + $0x4] sm:$0xf] %vm148, %v145
    %151 = vst.msk [vmem:[%s3 + $0x8] sm:$0xf] %vm148, %v146
    %152 = vst.msk [vmem:[%s3 + $0xc] sm:$0xf] %vm148, %v147
  $region21: #{bert_classifier_forward.16} parent=0 // pred_fallthru
    _
  // Predicated region
  $region22: #{bert_classifier_forward.16} parent=0 // pred_check
    _
  $region23: #{bert_classifier_forward.16} parent=0 // pred_check_branch
    %154 = sbr.rel (0) target = $region25
  $region24: #{bert_classifier_forward.16} parent=0 // pred_region
    _
  $region25: #{bert_classifier_forward.16} parent=0 // pred_fallthru
    _
  // Predicated region
  $region26: #{bert_classifier_forward.16} parent=0 // pred_check
    _
  $region27: #{bert_classifier_forward.16} parent=0 // pred_check_branch
    %156 = sbr.rel (0) target = $region29
  $region28: #{bert_classifier_forward.16} parent=0 // pred_region
    _
  $region29: #{bert_classifier_forward.16} parent=0 // pred_fallthru
    _

// kernel: bert_classifier_forward.23
$region0: #{bert_classifier_forward.23}
  #allocation0 [shape = 'u32[]', space=smem, size = 0x4, offset = 0x4, fixed_abs, tag = 'smem constant byte address 0x4 - core index']
  #allocation1 [shape = 'u32[72,128]{1,0:T(1,128)}', space=vmem, size = 0x9000, scoped, tag = 'internal scratch']
  %s0 = inlined_call_operand.vmem [shape: bf16[2,32], index: 0, kind: input, shape index: {}]
  %s1 = inlined_call_operand.vmem [shape: bf16[32,32], index: 1, kind: input, shape index: {}]
  %s2 = inlined_call_operand.vmem [shape: f32[1,32], index: 2, kind: input, shape index: {}]
  %s3 = inlined_call_operand.vmem [shape: bf16[32,128], index: 3, kind: input, shape index: {}]
  %s4 = inlined_call_operand.vmem [shape: f32[1,128], index: 4, kind: input, shape index: {}]
  %s5 = inlined_call_operand.hbm [shape: f32[2,128], index: 5, kind: output, shape index: {}]
  %s6 = sld [smem:[#allocation0]]
  $region30: #{bert_classifier_forward.23} parent=0
    _
  %s8 = ssub.s32 1, %s6
  %s9 = scalar_select 0, %s8, %s6
  $region1: #{bert_classifier_forward.23} parent=0
    #allocation2 [shape = 'u8[1024]{0}', space=vmem, size = 0x400, scoped, tag = 'output window, operand 0, single buffered']
    #allocation3 [shape = 's32[1]{0}', space=sflag, size = 0x4, scoped, tag = 'scoped memory for bert_classifier_forward.23']
    %10 = vsyncpa [#allocation3], 0
    // Predicated region
    $region2: #{bert_classifier_forward.23} parent=1 // pred_check
      _
    $region3: #{bert_classifier_forward.23} parent=1 // pred_check_branch
      %12 = sbr.rel (0) target = $region5
    $region4: #{bert_classifier_forward.23} parent=1 // pred_region
      _
    $region5: #{bert_classifier_forward.23} parent=1 // pred_fallthru
      _
    // Predicated region
    $region6: #{bert_classifier_forward.23} parent=1 // pred_check
      _
    $region7: #{bert_classifier_forward.23} parent=1 // pred_check_branch
      %14 = sbr.rel (0) target = $region9
    $region8: #{bert_classifier_forward.23} parent=1 // pred_region
      _
    $region9: #{bert_classifier_forward.23} parent=1 // pred_fallthru
      _
    // Predicated region
    $region10: #{bert_classifier_forward.23} parent=1 // pred_check
      _
    $region11: #{bert_classifier_forward.23} parent=1 // pred_check_branch
      %16 = sbr.rel (0) target = $region13
    $region12: #{bert_classifier_forward.23} parent=1 // pred_region
      _
    $region13: #{bert_classifier_forward.23} parent=1 // pred_fallthru
      _
    // Predicated region
    $region14: #{bert_classifier_forward.23} parent=1 // pred_check
      _
    $region15: #{bert_classifier_forward.23} parent=1 // pred_check_branch
      %18 = sbr.rel (0) target = $region17
    $region16: #{bert_classifier_forward.23} parent=1 // pred_region
      _
    $region17: #{bert_classifier_forward.23} parent=1 // pred_fallthru
      _
    // Predicated region
    $region18: #{bert_classifier_forward.23} parent=1 // pred_check
      _
    $region19: #{bert_classifier_forward.23} parent=1 // pred_check_branch
      %20 = sbr.rel (0) target = $region21
    $region20: #{bert_classifier_forward.23} parent=1 // pred_region
      _
    $region21: #{bert_classifier_forward.23} parent=1 // pred_fallthru
      _
    %v22 = vld [vmem:[%s0] sm:$0x1]
    %v23 = vld [vmem:[%s1] sm:$0xf]
    %v24 = vld [vmem:[%s1 + $0x4] sm:$0xf]
    %v25 = vld [vmem:[%s1 + $0x8] sm:$0xf]
    %v26 = vld [vmem:[%s1 + $0xc] sm:$0xf]
    %v27 = vld [vmem:[%s2] sm:$0x1]
    %v29 = vperm.slane %v27, 0
    %v35 = vunpack.c.l.b16 %v23
    %v36 = vunpack.c.l.b16 %v24
    %v37 = vunpack.c.l.b16 %v25
    %v38 = vunpack.c.l.b16 %v26
    %v39 = vpack.c.b16 %v36, %v35
    %v40 = vpack.c.b16 %v38, %v37
    %vm43 = vcmask 261120
    %v45 = vsel %vm43, %v22, 0
    %47 = vmatpush.bf16.msra.mxu0 0
    %48 = vmatpush.bf16.msra.mxu0 0
    %49 = vmatpush.bf16.msra.mxu0 0
    %50 = vmatpush.bf16.msra.mxu0 0
    %51 = vmatpush.bf16.msra.mxu0 0
    %52 = vmatpush.bf16.msra.mxu0 0
    %53 = vmatpush.bf16.msra.mxu0 %v40
    %54 = vmatpush.bf16.msra.mxu0 %v39
    %55 = vmatmul.bf16.gmra.mxu0 %v45
    %v56 = vpop.f32.mrf.mxu0
    %v57 = vadd.f32 %v29, %v56
    %v58 = vpop.f32.mrf.mxu0
    %59 = vdwg.mxu0
    %v60 = vtanh.pop %v57
    %v61 = vpack.c.bf16 %v60, %v60
    %v62 = vld [vmem:[%s3] sm:$0xf]
    %v63 = vld [vmem:[%s3 + $0x4] sm:$0xf]
    %v64 = vld [vmem:[%s3 + $0x8] sm:$0xf]
    %v65 = vld [vmem:[%s3 + $0xc] sm:$0xf]
    %v66 = vld [vmem:[%s4] sm:$0x1]
    %v68 = vperm.slane %v66, 0
    %v74 = vunpack.c.l.b16 %v62
    %v75 = vunpack.c.l.b16 %v63
    %v76 = vunpack.c.l.b16 %v64
    %v77 = vunpack.c.l.b16 %v65
    %v78 = vpack.c.b16 %v75, %v74
    %v79 = vpack.c.b16 %v77, %v76
    %v83 = vsel %vm43, %v61, 0
    %85 = vmatpush.bf16.msra.mxu0 0
    %86 = vmatpush.bf16.msra.mxu0 0
    %87 = vmatpush.bf16.msra.mxu0 0
    %88 = vmatpush.bf16.msra.mxu0 0
    %89 = vmatpush.bf16.msra.mxu0 0
    %90 = vmatpush.bf16.msra.mxu0 0
    %91 = vmatpush.bf16.msra.mxu0 %v79
    %92 = vmatpush.bf16.msra.mxu0 %v78
    %93 = vmatmul.bf16.gmra.mxu0 %v83
    %v94 = vpop.f32.mrf.mxu0
    %v95 = vadd.f32 %v68, %v94
    %v96 = vpop.f32.mrf.mxu0
    %97 = vdwg.mxu0
    %98 = vst [vmem:[#allocation2] sm:$0x3] %v95
    // Predicated region
    $region22: #{bert_classifier_forward.23} parent=1 // pred_check
      _
    $region23: #{bert_classifier_forward.23} parent=1 // pred_check_branch
      %100 = sbr.rel (0) target = $region25
    $region24: #{bert_classifier_forward.23} parent=1 // pred_region
      %102 = vsyncadd [#allocation3], 0
      %s104 = sshll.u32 [#allocation2], 4
      %s105 = int_to_ptr.vmem [resolvable:$true] %s104
      %s106 = sshll.u32 %s5, 4
      %s107 = int_to_ptr.hbm [resolvable:$true] %s106
      %109 = dma.vmem_to_hbm [thread:$0]  %s105, 32, %s107, [#allocation3]
    $region25: #{bert_classifier_forward.23} parent=1 // pred_fallthru
      _
    // Predicated region
    $region26: #{bert_classifier_forward.23} parent=1 // pred_check
      _
    $region27: #{bert_classifier_forward.23} parent=1 // pred_check_branch
      %111 = sbr.rel (0) target = $region29
    $region28: #{bert_classifier_forward.23} parent=1 // pred_region
      %113 = dma.done [#allocation3], 32
    $region29: #{bert_classifier_forward.23} parent=1 // pred_fallthru
      _
    %114 = vsyncpa [#allocation3], 1

// kernel: bert_classifier_forward.17
$region0: #{bert_classifier_forward.17}
  #allocation0 [shape = 'u32[]', space=smem, size = 0x4, offset = 0x4, fixed_abs, tag = 'smem constant byte address 0x4 - core index']
  #allocation1 [shape = 'u32[72,128]{1,0:T(1,128)}', space=vmem, size = 0x9000, scoped, tag = 'internal scratch']
  #allocation2 [shape = 'f32[32,32]{1,0:T(8,128)}', space=vmem, size = 0x4000, scoped, tag = 'scratch operand']
  %s0 = inlined_call_operand.vmem [shape: bf16[32,64], index: 0, kind: input, shape index: {}]
  %s1 = inlined_call_operand.vmem [shape: bf16[64,32], index: 1, kind: input, shape index: {}]
  %s2 = inlined_call_operand.vmem [shape: f32[1,32], index: 2, kind: input, shape index: {}]
  %s3 = inlined_call_operand.vmem [shape: bf16[32,32], index: 3, kind: input, shape index: {}]
  %s4 = inlined_call_operand.vmem [shape: f32[1,32], index: 4, kind: input, shape index: {}]
  %s5 = inlined_call_operand.vmem [shape: f32[1,32], index: 5, kind: input, shape index: {}]
  %s6 = inlined_call_operand.vmem [shape: bf16[32,32], index: 6, kind: output, shape index: {}]
  %s7 = sld [smem:[#allocation0]]
  $region42: #{bert_classifier_forward.17} parent=0
    _
  %s9 = ssub.s32 1, %s7
  %s10 = scalar_select 0, %s9, %s7
  // Predicated region
  $region2: #{bert_classifier_forward.17} parent=0 // pred_check
    _
  $region3: #{bert_classifier_forward.17} parent=0 // pred_check_branch
    %12 = sbr.rel (0) target = $region5
  $region4: #{bert_classifier_forward.17} parent=0 // pred_region
    _
  $region5: #{bert_classifier_forward.17} parent=0 // pred_fallthru
    _
  // Predicated region
  $region6: #{bert_classifier_forward.17} parent=0 // pred_check
    _
  $region7: #{bert_classifier_forward.17} parent=0 // pred_check_branch
    %14 = sbr.rel (0) target = $region9
  $region8: #{bert_classifier_forward.17} parent=0 // pred_region
    _
  $region9: #{bert_classifier_forward.17} parent=0 // pred_fallthru
    _
  // Predicated region
  $region10: #{bert_classifier_forward.17} parent=0 // pred_check
    _
  $region11: #{bert_classifier_forward.17} parent=0 // pred_check_branch
    %16 = sbr.rel (0) target = $region13
  $region12: #{bert_classifier_forward.17} parent=0 // pred_region
    _
  $region13: #{bert_classifier_forward.17} parent=0 // pred_fallthru
    _
  // Predicated region
  $region14: #{bert_classifier_forward.17} parent=0 // pred_check
    _
  $region15: #{bert_classifier_forward.17} parent=0 // pred_check_branch
    %18 = sbr.rel (0) target = $region17
  $region16: #{bert_classifier_forward.17} parent=0 // pred_region
    _
  $region17: #{bert_classifier_forward.17} parent=0 // pred_fallthru
    _
  // Predicated region
  $region18: #{bert_classifier_forward.17} parent=0 // pred_check
    _
  $region19: #{bert_classifier_forward.17} parent=0 // pred_check_branch
    %20 = sbr.rel (0) target = $region21
  $region20: #{bert_classifier_forward.17} parent=0 // pred_region
    _
  $region21: #{bert_classifier_forward.17} parent=0 // pred_fallthru
    _
  // Predicated region
  $region22: #{bert_classifier_forward.17} parent=0 // pred_check
    _
  $region23: #{bert_classifier_forward.17} parent=0 // pred_check_branch
    %22 = sbr.rel (0) target = $region25
  $region24: #{bert_classifier_forward.17} parent=0 // pred_region
    _
  $region25: #{bert_classifier_forward.17} parent=0 // pred_fallthru
    _
  %p24 = scmp.eq.s32.totalorder 0, 0
  // Predicated region
  $region26: #{bert_classifier_forward.17} parent=0 // pred_check
    %p25 = pneg %p24
  $region27: #{bert_classifier_forward.17} parent=0 // pred_check_branch
    %27 = sbr.rel (%p25) target = $region29
  $region28: #{bert_classifier_forward.17} parent=0 // pred_region
    %vm28 = vcmask 261120
    %29 = vst.msk [vmem:[#allocation2] sm:$0xff] %vm28, 0.0
    %30 = vst.msk [vmem:[#allocation2 + $0x8] sm:$0xff] %vm28, 0.0
    %31 = vst.msk [vmem:[#allocation2 + $0x10] sm:$0xff] %vm28, 0.0
    %32 = vst.msk [vmem:[#allocation2 + $0x18] sm:$0xff] %vm28, 0.0
  $region29: #{bert_classifier_forward.17} parent=0 // pred_fallthru
    _
  %v33 = vld [vmem:[#allocation2] sm:$0xff]
  %v34 = vld [vmem:[#allocation2 + $0x8] sm:$0xff]
  %v35 = vld [vmem:[#allocation2 + $0x10] sm:$0xff]
  %v36 = vld [vmem:[#allocation2 + $0x18] sm:$0xff]
  %v37 = vld [vmem:[%s0] sm:$0xf]
  %v38 = vld [vmem:[%s0 + $0x4] sm:$0xf]
  %v39 = vld [vmem:[%s0 + $0x8] sm:$0xf]
  %v40 = vld [vmem:[%s0 + $0xc] sm:$0xf]
  %v41 = vld [vmem:[%s1] sm:$0xf]
  %v42 = vld [vmem:[%s1 + $0x4] sm:$0xf]
  %v43 = vld [vmem:[%s1 + $0x8] sm:$0xf]
  %v44 = vld [vmem:[%s1 + $0xc] sm:$0xf]
  %v45 = vld [vmem:[%s1 + $0x10] sm:$0xf]
  %v46 = vld [vmem:[%s1 + $0x14] sm:$0xf]
  %v47 = vld [vmem:[%s1 + $0x18] sm:$0xf]
  %v48 = vld [vmem:[%s1 + $0x1c] sm:$0xf]
  %v53 = vunpack.c.l.b16 %v37
  %v54 = vunpack.c.l.b16 %v38
  %v55 = vunpack.c.l.b16 %v39
  %v56 = vunpack.c.l.b16 %v40
  %v57 = vpack.c.b16 %v54, %v53
  %v58 = vpack.c.b16 %v56, %v55
  %v67 = vunpack.c.l.b16 %v41
  %v68 = vunpack.c.l.b16 %v42
  %v69 = vunpack.c.l.b16 %v43
  %v70 = vunpack.c.l.b16 %v44
  %v71 = vunpack.c.l.b16 %v45
  %v72 = vunpack.c.l.b16 %v46
  %v73 = vunpack.c.l.b16 %v47
  %v74 = vunpack.c.l.b16 %v48
  %v75 = vpack.c.b16 %v68, %v67
  %v76 = vpack.c.b16 %v70, %v69
  %v77 = vpack.c.b16 %v72, %v71
  %v78 = vpack.c.b16 %v74, %v73
  %vm83 = vcmask 523264
  %v85 = vsel %vm83, %v57, 0
  %v88 = vsel %vm83, %v58, 0
  %90 = vmatpush.bf16.msra.mxu0 0
  %91 = vmatpush.bf16.msra.mxu0 0
  %92 = vmatpush.bf16.msra.mxu0 0
  %93 = vmatpush.bf16.msra.mxu0 0
  %94 = vmatpush.bf16.msra.mxu0 %v78
  %95 = vmatpush.bf16.msra.mxu0 %v77
  %96 = vmatpush.bf16.msra.mxu0 %v76
  %97 = vmatpush.bf16.msra.mxu0 %v75
  %98 = vmatmul.bf16.gmra.mxu0 %v85
  %v99 = vpop.f32.mrf.mxu0
  %v100 = vadd.f32 0.0, %v99
  %v101 = vpop.f32.mrf.mxu0
  %v102 = vadd.f32 0.0, %v101
  %103 = vmatmul.bf16.gmra.mxu0 %v88
  %v104 = vpop.f32.mrf.mxu0
  %v105 = vadd.f32 0.0, %v104
  %v106 = vpop.f32.mrf.mxu0
  %v107 = vadd.f32 0.0, %v106
  %108 = vdwg.mxu0
  %v109 = vadd.f32 %v33, %v100
  %v110 = vadd.f32 %v34, %v102
  %v111 = vadd.f32 %v35, %v105
  %v112 = vadd.f32 %v36, %v107
  %vm113 = vcmask 261120
  %114 = vst.msk [vmem:[#allocation2] sm:$0xff] %vm113, %v109
  %115 = vst.msk [vmem:[#allocation2 + $0x8] sm:$0xff] %vm113, %v110
  %116 = vst.msk [vmem:[#allocation2 + $0x10] sm:$0xff] %vm113, %v111
  %117 = vst.msk [vmem:[#allocation2 + $0x18] sm:$0xff] %vm113, %v112
  // Predicated region
  $region30: #{bert_classifier_forward.17} parent=0 // pred_check
    %p118 = pneg %p24
  $region31: #{bert_classifier_forward.17} parent=0 // pred_check_branch
    %120 = sbr.rel (%p118) target = $region33
  $region32: #{bert_classifier_forward.17} parent=0 // pred_region
    %v121 = vld [vmem:[#allocation2] sm:$0xff]
    %v122 = vld [vmem:[#allocation2 + $0x8] sm:$0xff]
    %v123 = vld [vmem:[#allocation2 + $0x10] sm:$0xff]
    %v124 = vld [vmem:[#allocation2 + $0x18] sm:$0xff]
    %v125 = vld [vmem:[%s2] sm:$0x1]
    %v127 = vperm.slane %v125, 0
    %v129 = vadd.f32 %v121, %v127
    %v130 = vadd.f32 %v122, %v127
    %v131 = vadd.f32 %v123, %v127
    %v132 = vadd.f32 %v124, %v127
    %v133 = vld [vmem:[%s3] sm:$0xf]
    %v134 = vld [vmem:[%s3 + $0x4] sm:$0xf]
    %v135 = vld [vmem:[%s3 + $0x8] sm:$0xf]
    %v136 = vld [vmem:[%s3 + $0xc] sm:$0xf]
    %v137 = vunpack.c.l.bf16 %v133
    %v138 = vunpack.c.l.bf16 %v134
    %v139 = vunpack.c.l.bf16 %v135
    %v140 = vunpack.c.l.bf16 %v136
    %v141 = vadd.f32 %v129, %v137
    %v142 = vadd.f32 %v130, %v138
    %v143 = vadd.f32 %v131, %v139
    %v144 = vadd.f32 %v132, %v140
    %v145 = vsel %vm113, %v141, 0.0
    %146 = vadd.xlane.f32.xlu0 %v145
    %v147 = vpop.xlane.xlu0 %146
    %v148 = vsel %vm113, %v142, 0.0
    %149 = vadd.xlane.f32.xlu0 %v148
    %v150 = vpop.xlane.xlu0 %149
    %v151 = vsel %vm113, %v143, 0.0
    %152 = vadd.xlane.f32.xlu0 %v151
    %v153 = vpop.xlane.xlu0 %152
    %v154 = vsel %vm113, %v144, 0.0
    %155 = vadd.xlane.f32.xlu0 %v154
    %v156 = vpop.xlane.xlu0 %155
    %v157 = vrcp.pop 32.0
    %v158 = vmul.f32 32.0, %v157
    %v159 = vsub.f32 1.0, %v158
    %v160 = vmul.f32 %v157, %v159
    %v161 = vadd.f32 %v157, %v160
    %vm162 = vweird.f32 %v157
    %v163 = vsel %vm162, %v157, %v161
    %v164 = vmul.f32 %v147, %v163
    %v165 = vmul.f32 %v150, %v163
    %v166 = vmul.f32 %v153, %v163
    %v167 = vmul.f32 %v156, %v163
    %v168 = vsub.f32 %v141, %v164
    %v169 = vsub.f32 %v142, %v165
    %v170 = vsub.f32 %v143, %v166
    %v171 = vsub.f32 %v144, %v167
    %v172 = vmul.f32 %v168, %v168
    %v173 = vmul.f32 %v169, %v169
    %v174 = vmul.f32 %v170, %v170
    %v175 = vmul.f32 %v171, %v171
    %v176 = vsel %vm113, %v172, 0.0
    %177 = vadd.xlane.f32.xlu0 %v176
    %v178 = vpop.xlane.xlu0 %177
    %v179 = vsel %vm113, %v173, 0.0
    %180 = vadd.xlane.f32.xlu0 %v179
    %v181 = vpop.xlane.xlu0 %180
    %v182 = vsel %vm113, %v174, 0.0
    %183 = vadd.xlane.f32.xlu0 %v182
    %v184 = vpop.xlane.xlu0 %183
    %v185 = vsel %vm113, %v175, 0.0
    %186 = vadd.xlane.f32.xlu0 %v185
    %v187 = vpop.xlane.xlu0 %186
    %v188 = vmul.f32 %v178, %v163
    %v189 = vmul.f32 %v181, %v163
    %v190 = vmul.f32 %v184, %v163
    %v191 = vmul.f32 %v187, %v163
    %v192 = vadd.f32 %v188, 1e-12
    %v193 = vadd.f32 %v189, 1e-12
    %v194 = vadd.f32 %v190, 1e-12
    %v195 = vadd.f32 %v191, 1e-12
    %v196 = vrsqrt.pop %v192
    %v197 = vmul.f32 %v196, %v192
    %v198 = vmul.f32 %v197, %v196
    %v199 = vmul.f32 0.5, %v198
    %v200 = vsub.f32 1.5, %v199
    %v201 = vmul.f32 %v196, %v200
    %vm202 = vweird.f32 %v192
    %vm203 = vweird.f32 %v196
    %vm204 = vmor %vm202, %vm203
    %v205 = vsel %vm204, %v196, %v201
    %v206 = vrsqrt.pop %v193
    %v207 = vmul.f32 %v206, %v193
    %v208 = vmul.f32 %v207, %v206
    %v209 = vmul.f32 0.5, %v208
    %v210 = vsub.f32 1.5, %v209
    %v211 = vmul.f32 %v206, %v210
    %vm212 = vweird.f32 %v193
    %vm213 = vweird.f32 %v206
    %vm214 = vmor %vm212, %vm213
    %v215 = vsel %vm214, %v206, %v211
    %v216 = vrsqrt.pop %v194
    %v217 = vmul.f32 %v216, %v194
    %v218 = vmul.f32 %v217, %v216
    %v219 = vmul.f32 0.5, %v218
    %v220 = vsub.f32 1.5, %v219
    %v221 = vmul.f32 %v216, %v220
    %vm222 = vweird.f32 %v194
    %vm223 = vweird.f32 %v216
    %vm224 = vmor %vm222, %vm223
    %v225 = vsel %vm224, %v216, %v221
    %v226 = vrsqrt.pop %v195
    %v227 = vmul.f32 %v226, %v195
    %v228 = vmul.f32 %v227, %v226
    %v229 = vmul.f32 0.5, %v228
    %v230 = vsub.f32 1.5, %v229
    %v231 = vmul.f32 %v226, %v230
    %vm232 = vweird.f32 %v195
    %vm233 = vweird.f32 %v226
    %vm234 = vmor %vm232, %vm233
    %v235 = vsel %vm234, %v226, %v231
    %v236 = vmul.f32 %v168, %v205
    %v237 = vmul.f32 %v169, %v215
    %v238 = vmul.f32 %v170, %v225
    %v239 = vmul.f32 %v171, %v235
    %v240 = vld [vmem:[%s4] sm:$0x1]
    %v242 = vperm.slane %v240, 0
    %v244 = vmul.f32 %v236, %v242
    %v245 = vmul.f32 %v237, %v242
    %v246 = vmul.f32 %v238, %v242
    %v247 = vmul.f32 %v239, %v242
    %v248 = vld [vmem:[%s5] sm:$0x1]
    %v250 = vperm.slane %v248, 0
    %v252 = vadd.f32 %v244, %v250
    %v253 = vadd.f32 %v245, %v250
    %v254 = vadd.f32 %v246, %v250
    %v255 = vadd.f32 %v247, %v250
    %v256 = vpack.c.bf16 %v252, %v252
    %v257 = vpack.c.bf16 %v253, %v253
    %v258 = vpack.c.bf16 %v254, %v254
    %v259 = vpack.c.bf16 %v255, %v255
    %vm260 = vcmask 257024
    %261 = vst.msk [vmem:[%s6] sm:$0xf] %vm260, %v256
    %262 = vst.msk [vmem:[%s6 + $0x4] sm:$0xf] %vm260, %v257
    %263 = vst.msk [vmem:[%s6 + $0x8] sm:$0xf] %vm260, %v258
    %264 = vst.msk [vmem:[%s6 + $0xc] sm:$0xf] %vm260, %v259
  $region33: #{bert_classifier_forward.17} parent=0 // pred_fallthru
    _
  // Predicated region
  $region34: #{bert_classifier_forward.17} parent=0 // pred_check
    _
  $region35: #{bert_classifier_forward.17} parent=0 // pred_check_branch
    %266 = sbr.rel (0) target = $region37
  $region36: #{bert_classifier_forward.17} parent=0 // pred_region
    _
  $region37: #{bert_classifier_forward.17} parent=0 // pred_fallthru
    _
  // Predicated region
  $region38: #{bert_classifier_forward.17} parent=0 // pred_check
    _
  $region39: #{bert_classifier_forward.17} parent=0 // pred_check_branch
    %268 = sbr.rel (0) target = $region41
  $region40: #{bert_classifier_forward.17} parent=0 // pred_region
    _
  $region41: #{bert_classifier_forward.17} parent=0 // pred_fallthru
    _

</llo_original>
